<compile_context>
chip_gen: v7x
topology: tpu7x:2x2x1
jax: 0.10.0
libtpu: 0.0.40
codegen_flags: <defaults>
</compile_context>

<pallas_src>
import functools

import jax
import jax.numpy as jnp
from jax.experimental import pallas as pl
from jax.experimental.pallas import tpu as pltpu


# ------------------------- fused sequence-gather + GRU stack + decoder ---------
def _gru_decoder_kernel(label_ref, pooled_ref, *refs, n_layers, T, B, B_pad):
    # refs = (wi, wh, bi, bh) * n_layers, dec_w, dec_b, preds_out, seq_scr, act_scr
    layer_refs = refs[:4 * n_layers]
    dec_w_ref = refs[4 * n_layers]          # [1, H]   f32
    dec_b_ref = refs[4 * n_layers + 1]      # [1, 1]   f32
    preds_ref = refs[4 * n_layers + 2]      # [B_pad, T] output
    seq_scr = refs[4 * n_layers + 3]        # VMEM [T*B_pad, F] f32
    act_scr = refs[4 * n_layers + 4]        # VMEM [T*B_pad, H] f32

    H = act_scr.shape[1]

    # ---- sequence construction: gather pooled rows via the SMEM label map.
    # Replaces the XLA `pooled[label_map.T]` gather + pad + HBM round-trip.
    seq_scr[...] = jnp.zeros_like(seq_scr)              # zero the padded batch rows
    for t in range(T):
        for b in range(B):
            g = label_ref[b, t]                         # scalar graph index (SMEM)
            seq_scr[pl.ds(t * B_pad + b, 1), :] = pooled_ref[pl.ds(g, 1), :]

    w_row = dec_w_ref[...]                              # [1, H] decoder weight row

    x_slab = seq_scr
    cols = []
    for l in range(n_layers):
        wi = layer_refs[4 * l][...]                     # [in_f, 3H] bf16 (gates r|z|n)
        wh = layer_refs[4 * l + 1][...]                 # [H,    3H] bf16
        bi = layer_refs[4 * l + 2][...]                 # [1,    3H] f32
        bh = layer_refs[4 * l + 3][...]                 # [1,    3H] f32
        last = l == n_layers - 1

        # Hoisted input-to-hidden matmul: one MXU call over the whole layer input
        # slab instead of T tiny matmuls inside the serial recurrence.
        gi_all = jnp.dot(x_slab[...].astype(jnp.bfloat16), wi,
                         preferred_element_type=jnp.float32) + bi   # [T*B_pad, 3H]

        # T is small & static: fully unrolled timestep loop (no per-step grid
        # overhead, full LLO visibility). Only h @ wh remains in the recurrence.
        h = jnp.zeros((B_pad, H), jnp.float32)
        cols = []
        for t in range(T):
            gi = gi_all[t * B_pad:(t + 1) * B_pad, :]               # static, aligned
            gh = jnp.dot(h.astype(jnp.bfloat16), wh,
                         preferred_element_type=jnp.float32) + bh   # [B_pad, 3H]
            rz = jax.nn.sigmoid(gi[:, :2 * H] + gh[:, :2 * H])      # r|z in one pass
            r = rz[:, :H]
            z = rz[:, H:]
            n = jnp.tanh(gi[:, 2 * H:] + r * gh[:, 2 * H:])
            h = (1.0 - z) * n + z * h
            if last:
                # Fused decoder: Linear(H,1) as VPU mul + lane reduce on live h.
                cols.append(jnp.sum(h * w_row, axis=-1, keepdims=True))  # [B_pad, 1]
            else:
                act_scr[pl.ds(t * B_pad, B_pad), :] = h
        if not last:
            x_slab = act_scr

    # Assemble logits directly batch-major [B_pad, T]; single lane-dense store.
    logits = jnp.concatenate(cols, axis=1)                      # [B_pad, T]
    preds_ref[...] = jax.nn.sigmoid(logits + dec_b_ref[...])    # broadcast [1, 1]


def pallas_gru_decoder(pooled, label_map, gru_params, dec_params, *, T, B, B_pad):
    """pooled: [num_graphs, F] f32, label_map: [B, T] int32 -> preds [B_pad, T]."""
    num_graphs, F = pooled.shape
    H = gru_params[0]["wh"].shape[0]
    n_layers = len(gru_params)

    in_arrays = [pooled]
    in_specs = [pl.BlockSpec((num_graphs, F), lambda i, lm: (0, 0))]
    for lp in gru_params:
        in_f = lp["wi"].shape[0]
        in_arrays += [lp["wi"], lp["wh"], lp["bi"], lp["bh"]]
        in_specs += [
            pl.BlockSpec((in_f, 3 * H), lambda i, lm: (0, 0)),
            pl.BlockSpec((H, 3 * H), lambda i, lm: (0, 0)),
            pl.BlockSpec((1, 3 * H), lambda i, lm: (0, 0)),
            pl.BlockSpec((1, 3 * H), lambda i, lm: (0, 0)),
        ]
    in_arrays += [dec_params["w"], dec_params["b"]]
    in_specs += [
        pl.BlockSpec((1, H), lambda i, lm: (0, 0)),
        pl.BlockSpec((1, 1), lambda i, lm: (0, 0)),
    ]

    kernel = functools.partial(
        _gru_decoder_kernel, n_layers=n_layers, T=T, B=B, B_pad=B_pad)

    return pl.pallas_call(
        kernel,
        out_shape=jax.ShapeDtypeStruct((B_pad, T), jnp.float32),
        grid_spec=pltpu.PrefetchScalarGridSpec(
            num_scalar_prefetch=1,                     # label_map -> SMEM
            grid=(1,),
            in_specs=in_specs,
            out_specs=pl.BlockSpec((B_pad, T), lambda i, lm: (0, 0)),
            scratch_shapes=[
                pltpu.VMEM((T * B_pad, F), jnp.float32),   # gathered input sequence
                pltpu.VMEM((T * B_pad, H), jnp.float32),   # inter-layer activations
            ],
        ),
        compiler_params=pltpu.CompilerParams(dimension_semantics=("arbitrary",)),
    )(label_map, *in_arrays)


# ------------------------------------------------------------- parameters ------
def init_params(key, args):
    params = {"gcn": [], "gru": [], "dec": None}
    feats = list(zip(args["embedding_features"][:-1], args["embedding_features"][1:]))
    for a, b in feats:
        key, k1, k2, k3 = jax.random.split(key, 4)
        bound = 1.0 / float(a) ** 0.5
        w_self = jax.random.uniform(k1, (a, b), jnp.float32, -bound, bound)
        w_nbr = jax.random.uniform(k2, (a, b), jnp.float32, -bound, bound)
        params["gcn"].append(dict(
            w_cat=jnp.concatenate([w_self, w_nbr], axis=1),     # [a, 2b]: self | nbr
            b=jax.random.uniform(k3, (b,), jnp.float32, -bound, bound),
        ))
    F = args["embedding_features"][-1]
    H = args["hidden_size"]
    for layer in range(args["n_gru_layers"]):
        in_f = F if layer == 0 else H
        key, k1, k2, k3, k4 = jax.random.split(key, 5)
        bound = 1.0 / float(H) ** 0.5
        params["gru"].append(dict(
            # Gates fused r|z|n; MXU operands stored bf16, biases stay f32.
            wi=jax.random.uniform(k1, (in_f, 3 * H), jnp.float32,
                                  -bound, bound).astype(jnp.bfloat16),
            wh=jax.random.uniform(k2, (H, 3 * H), jnp.float32,
                                  -bound, bound).astype(jnp.bfloat16),
            bi=jax.random.uniform(k3, (1, 3 * H), jnp.float32, -bound, bound),
            bh=jax.random.uniform(k4, (1, 3 * H), jnp.float32, -bound, bound),
        ))
    key, k1, k2 = jax.random.split(key, 3)
    bound = 1.0 / float(H) ** 0.5
    params["dec"] = dict(
        w=jax.random.uniform(k1, (1, H), jnp.float32, -bound, bound),   # row vector
        b=jax.random.uniform(k2, (1, 1), jnp.float32, -bound, bound),
    )
    return params


# ---------------------------------------------------------------- forward ------
def gru_decoder_forward(params, x, edge_index, edge_attr, batch_labels, label_map,
                        *, num_graphs):
    # TODO(synk): GraphConvLayer is not defined in the reference; assuming
    # PyG-GraphConv semantics: x_i' = ReLU(W_self x_i + sum_{j->i} e_ji * W_nbr x_j + b).
    src, dst = edge_index[0], edge_index[1]
    for lp in params["gcn"]:
        out_f = lp["b"].shape[0]
        y = jnp.dot(x, lp["w_cat"])            # tiny matmul: let XLA fuse with scatter
        y_self = y[:, :out_f]
        y_nbr = y[:, out_f:]
        agg = jax.ops.segment_sum(y_nbr[src] * edge_attr[:, None], dst,
                                  num_segments=x.shape[0])
        x = jax.nn.relu(y_self + agg + lp["b"])

    # global_mean_pool over batch_labels
    sums = jax.ops.segment_sum(x, batch_labels, num_segments=num_graphs)
    counts = jax.ops.segment_sum(jnp.ones((x.shape[0],), jnp.float32), batch_labels,
                                 num_segments=num_graphs)
    pooled = sums / jnp.maximum(counts, 1.0)[:, None]           # [num_graphs, F]

    # group(x, label_map) + GRU stack + decoder: all fused in one pallas_call.
    B, T = label_map.shape
    B_pad = max(8, ((B + 7) // 8) * 8)                          # fill 8 sublanes/vreg
    preds_bt = pallas_gru_decoder(pooled, label_map.astype(jnp.int32),
                                  params["gru"], params["dec"],
                                  T=T, B=B, B_pad=B_pad)        # [B_pad, T]
    predictions = preds_bt[:B, :]                               # [B, T] plain slice

    # TODO(synk): packed/variable-length sequences (pad_packed_sequence) assumed
    # equal-length; under that assumption decoder(h[-1]) == decoder(out[:, -1]).
    final_prediction = predictions[:, -1:]                      # [B, 1]
    return predictions, final_prediction


# ------------------------------------------------------------------- main ------
if __name__ == "__main__":
    args = dict(embedding_features=[4, 16, 32], hidden_size=32, n_gru_layers=2)

    key = jax.random.PRNGKey(0)
    kp, kx, ks, kd, ke = jax.random.split(key, 5)
    params = init_params(kp, args)

    B, T = 2, 8                       # sequences, timesteps (graphs per sequence)
    nodes_per_graph = 3
    num_graphs = B * T                # 16 graphs
    N = num_graphs * nodes_per_graph  # 48 nodes
    E = 4 * N                         # 192 edges

    x = jax.random.normal(kx, (N, args["embedding_features"][0]), jnp.float32)

    # random edges, each constrained inside its own graph
    graph_of_edge = jnp.repeat(jnp.arange(num_graphs), E // num_graphs)
    src = graph_of_edge * nodes_per_graph + jax.random.randint(ks, (E,), 0, nodes_per_graph)
    dst = graph_of_edge * nodes_per_graph + jax.random.randint(kd, (E,), 0, nodes_per_graph)
    edge_index = jnp.stack([src, dst], axis=0).astype(jnp.int32)
    edge_attr = jax.random.uniform(ke, (E,), jnp.float32)

    batch_labels = jnp.repeat(jnp.arange(num_graphs), nodes_per_graph).astype(jnp.int32)
    label_map = jnp.arange(num_graphs, dtype=jnp.int32).reshape(B, T)

    fwd = jax.jit(functools.partial(gru_decoder_forward, num_graphs=num_graphs))
    predictions, final_prediction = fwd(params, x, edge_index, edge_attr,
                                        batch_labels, label_map)
    jax.block_until_ready((predictions, final_prediction))

    assert predictions.shape == (B, T)
    assert final_prediction.shape == (B, 1)
    assert bool(jnp.all(jnp.isfinite(predictions)))
    assert bool(jnp.all((predictions >= 0) & (predictions <= 1)))
    print("KERNEL_OK")
</pallas_src>

<mosaic_0001>
module attributes {stable_mosaic.version = 11 : i64} {
  func.func private @main(%arg0: i32) attributes {dimension_semantics = [#tpu.dimension_semantics<core_parallel>], iteration_bounds = array<i64: 2>, tpu.core_type = #tpu.core_type<sc_scalar_subcore>, window_params = []} {
    return
  }
}

module attributes {stable_mosaic.version = 11 : i64} {
  func.func private @main(%arg0: i32) attributes {dimension_semantics = [#tpu.dimension_semantics<core_parallel>], iteration_bounds = array<i64: 2>, tpu.core_type = #tpu.core_type<sc_scalar_subcore>, window_params = []} {
    return
  }
}

module attributes {stable_mosaic.version = 11 : i64} {
  func.func @_gru_decoder_kernel(%arg0: i32, %arg1: memref<2x8xi32, #tpu.memory_space<smem>>, %arg2: memref<16x32xf32, #tpu.memory_space<vmem>>, %arg3: memref<32x96xbf16, #tpu.memory_space<vmem>>, %arg4: memref<32x96xbf16, #tpu.memory_space<vmem>>, %arg5: memref<1x96xf32, #tpu.memory_space<vmem>>, %arg6: memref<1x96xf32, #tpu.memory_space<vmem>>, %arg7: memref<32x96xbf16, #tpu.memory_space<vmem>>, %arg8: memref<32x96xbf16, #tpu.memory_space<vmem>>, %arg9: memref<1x96xf32, #tpu.memory_space<vmem>>, %arg10: memref<1x96xf32, #tpu.memory_space<vmem>>, %arg11: memref<1x32xf32, #tpu.memory_space<vmem>>, %arg12: memref<1x1xf32, #tpu.memory_space<vmem>>, %arg13: memref<8x8xf32, #tpu.memory_space<vmem>>, %arg14: memref<64x32xf32, #tpu.memory_space<vmem>>, %arg15: memref<64x32xf32, #tpu.memory_space<vmem>>) attributes {dimension_semantics = [#tpu.dimension_semantics<arbitrary>], iteration_bounds = array<i64: 1>, scalar_prefetch = 1 : i64, scratch_operands = 2 : i64, tpu.core_type = #tpu.core_type<tc>, window_params = [{pipeline_mode = #tpu.pipeline_mode<synchronous>, transform_indices = @transform_0, window_bounds = array<i64: 16, 32>}, {pipeline_mode = #tpu.pipeline_mode<synchronous>, transform_indices = @transform_1, window_bounds = array<i64: 32, 96>}, {pipeline_mode = #tpu.pipeline_mode<synchronous>, transform_indices = @transform_2, window_bounds = array<i64: 32, 96>}, {pipeline_mode = #tpu.pipeline_mode<synchronous>, transform_indices = @transform_3, window_bounds = array<i64: 1, 96>}, {pipeline_mode = #tpu.pipeline_mode<synchronous>, transform_indices = @transform_4, window_bounds = array<i64: 1, 96>}, {pipeline_mode = #tpu.pipeline_mode<synchronous>, transform_indices = @transform_5, window_bounds = array<i64: 32, 96>}, {pipeline_mode = #tpu.pipeline_mode<synchronous>, transform_indices = @transform_6, window_bounds = array<i64: 32, 96>}, {pipeline_mode = #tpu.pipeline_mode<synchronous>, transform_indices = @transform_7, window_bounds = array<i64: 1, 96>}, {pipeline_mode = #tpu.pipeline_mode<synchronous>, transform_indices = @transform_8, window_bounds = array<i64: 1, 96>}, {pipeline_mode = #tpu.pipeline_mode<synchronous>, transform_indices = @transform_9, window_bounds = array<i64: 1, 32>}, {pipeline_mode = #tpu.pipeline_mode<synchronous>, transform_indices = @transform_10, window_bounds = array<i64: 1, 1>}, {pipeline_mode = #tpu.pipeline_mode<synchronous>, transform_indices = @transform_11, window_bounds = array<i64: 8, 8>}]} {
    %cst = arith.constant 0.000000e+00 : f32
    %0 = vector.broadcast %cst : f32 to vector<64x32xf32>
    %c0 = arith.constant 0 : index
    %c0_0 = arith.constant 0 : index
    %1 = vector.load %arg14[%c0, %c0_0] : memref<64x32xf32, #tpu.memory_space<vmem>>, vector<64x32xf32>
    tpu.vector_store %arg14[%c0, %c0_0], %0 {strides = array<i32>} : memref<64x32xf32, #tpu.memory_space<vmem>>, vector<64x32xf32>,
    %c0_1 = arith.constant 0 : index
    %c0_2 = arith.constant 0 : index
    %2 = memref.load %arg1[%c0_1, %c0_2] : memref<2x8xi32, #tpu.memory_space<smem>>
    %3 = arith.index_cast %2 : i32 to index
    %c0_3 = arith.constant 0 : index
    %4 = vector.load %arg2[%3, %c0_3] : memref<16x32xf32, #tpu.memory_space<vmem>>, vector<1x32xf32>
    %c0_4 = arith.constant 0 : index
    %c0_5 = arith.constant 0 : index
    %5 = vector.load %arg14[%c0_4, %c0_5] : memref<64x32xf32, #tpu.memory_space<vmem>>, vector<1x32xf32>
    tpu.vector_store %arg14[%c0_4, %c0_5], %4 {strides = array<i32>} : memref<64x32xf32, #tpu.memory_space<vmem>>, vector<1x32xf32>,
    %c1 = arith.constant 1 : index
    %c0_6 = arith.constant 0 : index
    %6 = memref.load %arg1[%c1, %c0_6] : memref<2x8xi32, #tpu.memory_space<smem>>
    %7 = arith.index_cast %6 : i32 to index
    %c0_7 = arith.constant 0 : index
    %8 = vector.load %arg2[%7, %c0_7] : memref<16x32xf32, #tpu.memory_space<vmem>>, vector<1x32xf32>
    %c1_8 = arith.constant 1 : index
    %c0_9 = arith.constant 0 : index
    %9 = vector.load %arg14[%c1_8, %c0_9] : memref<64x32xf32, #tpu.memory_space<vmem>>, vector<1x32xf32>
    tpu.vector_store %arg14[%c1_8, %c0_9], %8 {strides = array<i32>} : memref<64x32xf32, #tpu.memory_space<vmem>>, vector<1x32xf32>,
    %c0_10 = arith.constant 0 : index
    %c1_11 = arith.constant 1 : index
    %10 = memref.load %arg1[%c0_10, %c1_11] : memref<2x8xi32, #tpu.memory_space<smem>>
    %11 = arith.index_cast %10 : i32 to index
    %c0_12 = arith.constant 0 : index
    %12 = vector.load %arg2[%11, %c0_12] : memref<16x32xf32, #tpu.memory_space<vmem>>, vector<1x32xf32>
    %c8 = arith.constant 8 : index
    %c0_13 = arith.constant 0 : index
    %13 = vector.load %arg14[%c8, %c0_13] : memref<64x32xf32, #tpu.memory_space<vmem>>, vector<1x32xf32>
    tpu.vector_store %arg14[%c8, %c0_13], %12 {strides = array<i32>} : memref<64x32xf32, #tpu.memory_space<vmem>>, vector<1x32xf32>,
    %c1_14 = arith.constant 1 : index
    %c1_15 = arith.constant 1 : index
    %14 = memref.load %arg1[%c1_14, %c1_15] : memref<2x8xi32, #tpu.memory_space<smem>>
    %15 = arith.index_cast %14 : i32 to index
    %c0_16 = arith.constant 0 : index
    %16 = vector.load %arg2[%15, %c0_16] : memref<16x32xf32, #tpu.memory_space<vmem>>, vector<1x32xf32>
    %c9 = arith.constant 9 : index
    %c0_17 = arith.constant 0 : index
    %17 = vector.load %arg14[%c9, %c0_17] : memref<64x32xf32, #tpu.memory_space<vmem>>, vector<1x32xf32>
    tpu.vector_store %arg14[%c9, %c0_17], %16 {strides = array<i32>} : memref<64x32xf32, #tpu.memory_space<vmem>>, vector<1x32xf32>,
    %c0_18 = arith.constant 0 : index
    %c2 = arith.constant 2 : index
    %18 = memref.load %arg1[%c0_18, %c2] : memref<2x8xi32, #tpu.memory_space<smem>>
    %19 = arith.index_cast %18 : i32 to index
    %c0_19 = arith.constant 0 : index
    %20 = vector.load %arg2[%19, %c0_19] : memref<16x32xf32, #tpu.memory_space<vmem>>, vector<1x32xf32>
    %c16 = arith.constant 16 : index
    %c0_20 = arith.constant 0 : index
    %21 = vector.load %arg14[%c16, %c0_20] : memref<64x32xf32, #tpu.memory_space<vmem>>, vector<1x32xf32>
    tpu.vector_store %arg14[%c16, %c0_20], %20 {strides = array<i32>} : memref<64x32xf32, #tpu.memory_space<vmem>>, vector<1x32xf32>,
    %c1_21 = arith.constant 1 : index
    %c2_22 = arith.constant 2 : index
    %22 = memref.load %arg1[%c1_21, %c2_22] : memref<2x8xi32, #tpu.memory_space<smem>>
    %23 = arith.index_cast %22 : i32 to index
    %c0_23 = arith.constant 0 : index
    %24 = vector.load %arg2[%23, %c0_23] : memref<16x32xf32, #tpu.memory_space<vmem>>, vector<1x32xf32>
    %c17 = arith.constant 17 : index
    %c0_24 = arith.constant 0 : index
    %25 = vector.load %arg14[%c17, %c0_24] : memref<64x32xf32, #tpu.memory_space<vmem>>, vector<1x32xf32>
    tpu.vector_store %arg14[%c17, %c0_24], %24 {strides = array<i32>} : memref<64x32xf32, #tpu.memory_space<vmem>>, vector<1x32xf32>,
    %c0_25 = arith.constant 0 : index
    %c3 = arith.constant 3 : index
    %26 = memref.load %arg1[%c0_25, %c3] : memref<2x8xi32, #tpu.memory_space<smem>>
    %27 = arith.index_cast %26 : i32 to index
    %c0_26 = arith.constant 0 : index
    %28 = vector.load %arg2[%27, %c0_26] : memref<16x32xf32, #tpu.memory_space<vmem>>, vector<1x32xf32>
    %c24 = arith.constant 24 : index
    %c0_27 = arith.constant 0 : index
    %29 = vector.load %arg14[%c24, %c0_27] : memref<64x32xf32, #tpu.memory_space<vmem>>, vector<1x32xf32>
    tpu.vector_store %arg14[%c24, %c0_27], %28 {strides = array<i32>} : memref<64x32xf32, #tpu.memory_space<vmem>>, vector<1x32xf32>,
    %c1_28 = arith.constant 1 : index
    %c3_29 = arith.constant 3 : index
    %30 = memref.load %arg1[%c1_28, %c3_29] : memref<2x8xi32, #tpu.memory_space<smem>>
    %31 = arith.index_cast %30 : i32 to index
    %c0_30 = arith.constant 0 : index
    %32 = vector.load %arg2[%31, %c0_30] : memref<16x32xf32, #tpu.memory_space<vmem>>, vector<1x32xf32>
    %c25 = arith.constant 25 : index
    %c0_31 = arith.constant 0 : index
    %33 = vector.load %arg14[%c25, %c0_31] : memref<64x32xf32, #tpu.memory_space<vmem>>, vector<1x32xf32>
    tpu.vector_store %arg14[%c25, %c0_31], %32 {strides = array<i32>} : memref<64x32xf32, #tpu.memory_space<vmem>>, vector<1x32xf32>,
    %c0_32 = arith.constant 0 : index
    %c4 = arith.constant 4 : index
    %34 = memref.load %arg1[%c0_32, %c4] : memref<2x8xi32, #tpu.memory_space<smem>>
    %35 = arith.index_cast %34 : i32 to index
    %c0_33 = arith.constant 0 : index
    %36 = vector.load %arg2[%35, %c0_33] : memref<16x32xf32, #tpu.memory_space<vmem>>, vector<1x32xf32>
    %c32 = arith.constant 32 : index
    %c0_34 = arith.constant 0 : index
    %37 = vector.load %arg14[%c32, %c0_34] : memref<64x32xf32, #tpu.memory_space<vmem>>, vector<1x32xf32>
    tpu.vector_store %arg14[%c32, %c0_34], %36 {strides = array<i32>} : memref<64x32xf32, #tpu.memory_space<vmem>>, vector<1x32xf32>,
    %c1_35 = arith.constant 1 : index
    %c4_36 = arith.constant 4 : index
    %38 = memref.load %arg1[%c1_35, %c4_36] : memref<2x8xi32, #tpu.memory_space<smem>>
    %39 = arith.index_cast %38 : i32 to index
    %c0_37 = arith.constant 0 : index
    %40 = vector.load %arg2[%39, %c0_37] : memref<16x32xf32, #tpu.memory_space<vmem>>, vector<1x32xf32>
    %c33 = arith.constant 33 : index
    %c0_38 = arith.constant 0 : index
    %41 = vector.load %arg14[%c33, %c0_38] : memref<64x32xf32, #tpu.memory_space<vmem>>, vector<1x32xf32>
    tpu.vector_store %arg14[%c33, %c0_38], %40 {strides = array<i32>} : memref<64x32xf32, #tpu.memory_space<vmem>>, vector<1x32xf32>,
    %c0_39 = arith.constant 0 : index
    %c5 = arith.constant 5 : index
    %42 = memref.load %arg1[%c0_39, %c5] : memref<2x8xi32, #tpu.memory_space<smem>>
    %43 = arith.index_cast %42 : i32 to index
    %c0_40 = arith.constant 0 : index
    %44 = vector.load %arg2[%43, %c0_40] : memref<16x32xf32, #tpu.memory_space<vmem>>, vector<1x32xf32>
    %c40 = arith.constant 40 : index
    %c0_41 = arith.constant 0 : index
    %45 = vector.load %arg14[%c40, %c0_41] : memref<64x32xf32, #tpu.memory_space<vmem>>, vector<1x32xf32>
    tpu.vector_store %arg14[%c40, %c0_41], %44 {strides = array<i32>} : memref<64x32xf32, #tpu.memory_space<vmem>>, vector<1x32xf32>,
    %c1_42 = arith.constant 1 : index
    %c5_43 = arith.constant 5 : index
    %46 = memref.load %arg1[%c1_42, %c5_43] : memref<2x8xi32, #tpu.memory_space<smem>>
    %47 = arith.index_cast %46 : i32 to index
    %c0_44 = arith.constant 0 : index
    %48 = vector.load %arg2[%47, %c0_44] : memref<16x32xf32, #tpu.memory_space<vmem>>, vector<1x32xf32>
    %c41 = arith.constant 41 : index
    %c0_45 = arith.constant 0 : index
    %49 = vector.load %arg14[%c41, %c0_45] : memref<64x32xf32, #tpu.memory_space<vmem>>, vector<1x32xf32>
    tpu.vector_store %arg14[%c41, %c0_45], %48 {strides = array<i32>} : memref<64x32xf32, #tpu.memory_space<vmem>>, vector<1x32xf32>,
    %c0_46 = arith.constant 0 : index
    %c6 = arith.constant 6 : index
    %50 = memref.load %arg1[%c0_46, %c6] : memref<2x8xi32, #tpu.memory_space<smem>>
    %51 = arith.index_cast %50 : i32 to index
    %c0_47 = arith.constant 0 : index
    %52 = vector.load %arg2[%51, %c0_47] : memref<16x32xf32, #tpu.memory_space<vmem>>, vector<1x32xf32>
    %c48 = arith.constant 48 : index
    %c0_48 = arith.constant 0 : index
    %53 = vector.load %arg14[%c48, %c0_48] : memref<64x32xf32, #tpu.memory_space<vmem>>, vector<1x32xf32>
    tpu.vector_store %arg14[%c48, %c0_48], %52 {strides = array<i32>} : memref<64x32xf32, #tpu.memory_space<vmem>>, vector<1x32xf32>,
    %c1_49 = arith.constant 1 : index
    %c6_50 = arith.constant 6 : index
    %54 = memref.load %arg1[%c1_49, %c6_50] : memref<2x8xi32, #tpu.memory_space<smem>>
    %55 = arith.index_cast %54 : i32 to index
    %c0_51 = arith.constant 0 : index
    %56 = vector.load %arg2[%55, %c0_51] : memref<16x32xf32, #tpu.memory_space<vmem>>, vector<1x32xf32>
    %c49 = arith.constant 49 : index
    %c0_52 = arith.constant 0 : index
    %57 = vector.load %arg14[%c49, %c0_52] : memref<64x32xf32, #tpu.memory_space<vmem>>, vector<1x32xf32>
    tpu.vector_store %arg14[%c49, %c0_52], %56 {strides = array<i32>} : memref<64x32xf32, #tpu.memory_space<vmem>>, vector<1x32xf32>,
    %c0_53 = arith.constant 0 : index
    %c7 = arith.constant 7 : index
    %58 = memref.load %arg1[%c0_53, %c7] : memref<2x8xi32, #tpu.memory_space<smem>>
    %59 = arith.index_cast %58 : i32 to index
    %c0_54 = arith.constant 0 : index
    %60 = vector.load %arg2[%59, %c0_54] : memref<16x32xf32, #tpu.memory_space<vmem>>, vector<1x32xf32>
    %c56 = arith.constant 56 : index
    %c0_55 = arith.constant 0 : index
    %61 = vector.load %arg14[%c56, %c0_55] : memref<64x32xf32, #tpu.memory_space<vmem>>, vector<1x32xf32>
    tpu.vector_store %arg14[%c56, %c0_55], %60 {strides = array<i32>} : memref<64x32xf32, #tpu.memory_space<vmem>>, vector<1x32xf32>,
    %c1_56 = arith.constant 1 : index
    %c7_57 = arith.constant 7 : index
    %62 = memref.load %arg1[%c1_56, %c7_57] : memref<2x8xi32, #tpu.memory_space<smem>>
    %63 = arith.index_cast %62 : i32 to index
    %c0_58 = arith.constant 0 : index
    %64 = vector.load %arg2[%63, %c0_58] : memref<16x32xf32, #tpu.memory_space<vmem>>, vector<1x32xf32>
    %c57 = arith.constant 57 : index
    %c0_59 = arith.constant 0 : index
    %65 = vector.load %arg14[%c57, %c0_59] : memref<64x32xf32, #tpu.memory_space<vmem>>, vector<1x32xf32>
    tpu.vector_store %arg14[%c57, %c0_59], %64 {strides = array<i32>} : memref<64x32xf32, #tpu.memory_space<vmem>>, vector<1x32xf32>,
    %c0_60 = arith.constant 0 : index
    %c0_61 = arith.constant 0 : index
    %66 = vector.load %arg11[%c0_60, %c0_61] : memref<1x32xf32, #tpu.memory_space<vmem>>, vector<1x32xf32>
    %c0_62 = arith.constant 0 : index
    %c0_63 = arith.constant 0 : index
    %67 = vector.load %arg3[%c0_62, %c0_63] : memref<32x96xbf16, #tpu.memory_space<vmem>>, vector<32x96xbf16>
    %c0_64 = arith.constant 0 : index
    %c0_65 = arith.constant 0 : index
    %68 = vector.load %arg4[%c0_64, %c0_65] : memref<32x96xbf16, #tpu.memory_space<vmem>>, vector<32x96xbf16>
    %c0_66 = arith.constant 0 : index
    %c0_67 = arith.constant 0 : index
    %69 = vector.load %arg5[%c0_66, %c0_67] : memref<1x96xf32, #tpu.memory_space<vmem>>, vector<1x96xf32>
    %c0_68 = arith.constant 0 : index
    %c0_69 = arith.constant 0 : index
    %70 = vector.load %arg6[%c0_68, %c0_69] : memref<1x96xf32, #tpu.memory_space<vmem>>, vector<1x96xf32>
    %c0_70 = arith.constant 0 : index
    %c0_71 = arith.constant 0 : index
    %71 = vector.load %arg14[%c0_70, %c0_71] : memref<64x32xf32, #tpu.memory_space<vmem>>, vector<64x32xf32>
    %72 = arith.truncf %71 : vector<64x32xf32> to vector<64x32xbf16>
    %cst_72 = arith.constant dense<0.000000e+00> : vector<64x96xf32>
    %73 = tpu.matmul %72, %67, %cst_72 {dimension_numbers = #tpu.dot_dimension_numbers<[1], [0], [0], [1], [0, 0, 1, 1], [], []>} : vector<64x32xbf16>, vector<32x96xbf16>, vector<64x96xf32> -> vector<64x96xf32>
    %74 = vector.broadcast %69 : vector<1x96xf32> to vector<64x96xf32>
    %75 = arith.addf %73, %74 : vector<64x96xf32>
    %cst_73 = arith.constant 0.000000e+00 : f32
    %76 = vector.broadcast %cst_73 : f32 to vector<8x32xf32>
    %77 = vector.extract_strided_slice %75 {offsets = [0, 0], sizes = [8, 96], strides = [1, 1]} : vector<64x96xf32> to vector<8x96xf32>
    %78 = arith.truncf %76 : vector<8x32xf32> to vector<8x32xbf16>
    %cst_74 = arith.constant dense<0.000000e+00> : vector<8x96xf32>
    %79 = tpu.matmul %78, %68, %cst_74 {dimension_numbers = #tpu.dot_dimension_numbers<[1], [0], [0], [1], [0, 0, 1, 1], [], []>} : vector<8x32xbf16>, vector<32x96xbf16>, vector<8x96xf32> -> vector<8x96xf32>
    %80 = vector.broadcast %70 : vector<1x96xf32> to vector<8x96xf32>
    %81 = arith.addf %79, %80 : vector<8x96xf32>
    %82 = vector.extract_strided_slice %77 {offsets = [0, 0], sizes = [8, 64], strides = [1, 1]} : vector<8x96xf32> to vector<8x64xf32>
    %83 = vector.extract_strided_slice %81 {offsets = [0, 0], sizes = [8, 64], strides = [1, 1]} : vector<8x96xf32> to vector<8x64xf32>
    %84 = arith.addf %82, %83 : vector<8x64xf32>
    %85 = arith.negf %84 : vector<8x64xf32>
    %86 = math.exp %85 : vector<8x64xf32>
    %cst_75 = arith.constant 1.000000e+00 : f32
    %87 = vector.broadcast %cst_75 : f32 to vector<8x64xf32>
    %88 = arith.addf %87, %86 : vector<8x64xf32>
    %89 = arith.divf %87, %88 : vector<8x64xf32>
    %90 = vector.extract_strided_slice %89 {offsets = [0, 0], sizes = [8, 32], strides = [1, 1]} : vector<8x64xf32> to vector<8x32xf32>
    %91 = vector.extract_strided_slice %89 {offsets = [0, 32], sizes = [8, 32], strides = [1, 1]} : vector<8x64xf32> to vector<8x32xf32>
    %92 = vector.extract_strided_slice %77 {offsets = [0, 64], sizes = [8, 32], strides = [1, 1]} : vector<8x96xf32> to vector<8x32xf32>
    %93 = vector.extract_strided_slice %81 {offsets = [0, 64], sizes = [8, 32], strides = [1, 1]} : vector<8x96xf32> to vector<8x32xf32>
    %94 = arith.mulf %90, %93 : vector<8x32xf32>
    %95 = arith.addf %92, %94 : vector<8x32xf32>
    %96 = math.tanh %95 : vector<8x32xf32>
    %cst_76 = arith.constant 1.000000e+00 : f32
    %97 = vector.broadcast %cst_76 : f32 to vector<8x32xf32>
    %98 = arith.subf %97, %91 : vector<8x32xf32>
    %99 = arith.mulf %98, %96 : vector<8x32xf32>
    %100 = arith.mulf %91, %76 : vector<8x32xf32>
    %101 = arith.addf %99, %100 : vector<8x32xf32>
    %c0_77 = arith.constant 0 : index
    %c0_78 = arith.constant 0 : index
    %102 = vector.load %arg15[%c0_77, %c0_78] : memref<64x32xf32, #tpu.memory_space<vmem>>, vector<8x32xf32>
    tpu.vector_store %arg15[%c0_77, %c0_78], %101 {strides = array<i32>} : memref<64x32xf32, #tpu.memory_space<vmem>>, vector<8x32xf32>,
    %103 = vector.extract_strided_slice %75 {offsets = [8, 0], sizes = [8, 96], strides = [1, 1]} : vector<64x96xf32> to vector<8x96xf32>
    %104 = arith.truncf %101 : vector<8x32xf32> to vector<8x32xbf16>
    %cst_79 = arith.constant dense<0.000000e+00> : vector<8x96xf32>
    %105 = tpu.matmul %104, %68, %cst_79 {dimension_numbers = #tpu.dot_dimension_numbers<[1], [0], [0], [1], [0, 0, 1, 1], [], []>} : vector<8x32xbf16>, vector<32x96xbf16>, vector<8x96xf32> -> vector<8x96xf32>
    %106 = vector.broadcast %70 : vector<1x96xf32> to vector<8x96xf32>
    %107 = arith.addf %105, %106 : vector<8x96xf32>
    %108 = vector.extract_strided_slice %103 {offsets = [0, 0], sizes = [8, 64], strides = [1, 1]} : vector<8x96xf32> to vector<8x64xf32>
    %109 = vector.extract_strided_slice %107 {offsets = [0, 0], sizes = [8, 64], strides = [1, 1]} : vector<8x96xf32> to vector<8x64xf32>
    %110 = arith.addf %108, %109 : vector<8x64xf32>
    %111 = arith.negf %110 : vector<8x64xf32>
    %112 = math.exp %111 : vector<8x64xf32>
    %cst_80 = arith.constant 1.000000e+00 : f32
    %113 = vector.broadcast %cst_80 : f32 to vector<8x64xf32>
    %114 = arith.addf %113, %112 : vector<8x64xf32>
    %115 = arith.divf %113, %114 : vector<8x64xf32>
    %116 = vector.extract_strided_slice %115 {offsets = [0, 0], sizes = [8, 32], strides = [1, 1]} : vector<8x64xf32> to vector<8x32xf32>
    %117 = vector.extract_strided_slice %115 {offsets = [0, 32], sizes = [8, 32], strides = [1, 1]} : vector<8x64xf32> to vector<8x32xf32>
    %118 = vector.extract_strided_slice %103 {offsets = [0, 64], sizes = [8, 32], strides = [1, 1]} : vector<8x96xf32> to vector<8x32xf32>
    %119 = vector.extract_strided_slice %107 {offsets = [0, 64], sizes = [8, 32], strides = [1, 1]} : vector<8x96xf32> to vector<8x32xf32>
    %120 = arith.mulf %116, %119 : vector<8x32xf32>
    %121 = arith.addf %118, %120 : vector<8x32xf32>
    %122 = math.tanh %121 : vector<8x32xf32>
    %cst_81 = arith.constant 1.000000e+00 : f32
    %123 = vector.broadcast %cst_81 : f32 to vector<8x32xf32>
    %124 = arith.subf %123, %117 : vector<8x32xf32>
    %125 = arith.mulf %124, %122 : vector<8x32xf32>
    %126 = arith.mulf %117, %101 : vector<8x32xf32>
    %127 = arith.addf %125, %126 : vector<8x32xf32>
    %c8_82 = arith.constant 8 : index
    %c0_83 = arith.constant 0 : index
    %128 = vector.load %arg15[%c8_82, %c0_83] : memref<64x32xf32, #tpu.memory_space<vmem>>, vector<8x32xf32>
    tpu.vector_store %arg15[%c8_82, %c0_83], %127 {strides = array<i32>} : memref<64x32xf32, #tpu.memory_space<vmem>>, vector<8x32xf32>,
    %129 = vector.extract_strided_slice %75 {offsets = [16, 0], sizes = [8, 96], strides = [1, 1]} : vector<64x96xf32> to vector<8x96xf32>
    %130 = arith.truncf %127 : vector<8x32xf32> to vector<8x32xbf16>
    %cst_84 = arith.constant dense<0.000000e+00> : vector<8x96xf32>
    %131 = tpu.matmul %130, %68, %cst_84 {dimension_numbers = #tpu.dot_dimension_numbers<[1], [0], [0], [1], [0, 0, 1, 1], [], []>} : vector<8x32xbf16>, vector<32x96xbf16>, vector<8x96xf32> -> vector<8x96xf32>
    %132 = vector.broadcast %70 : vector<1x96xf32> to vector<8x96xf32>
    %133 = arith.addf %131, %132 : vector<8x96xf32>
    %134 = vector.extract_strided_slice %129 {offsets = [0, 0], sizes = [8, 64], strides = [1, 1]} : vector<8x96xf32> to vector<8x64xf32>
    %135 = vector.extract_strided_slice %133 {offsets = [0, 0], sizes = [8, 64], strides = [1, 1]} : vector<8x96xf32> to vector<8x64xf32>
    %136 = arith.addf %134, %135 : vector<8x64xf32>
    %137 = arith.negf %136 : vector<8x64xf32>
    %138 = math.exp %137 : vector<8x64xf32>
    %cst_85 = arith.constant 1.000000e+00 : f32
    %139 = vector.broadcast %cst_85 : f32 to vector<8x64xf32>
    %140 = arith.addf %139, %138 : vector<8x64xf32>
    %141 = arith.divf %139, %140 : vector<8x64xf32>
    %142 = vector.extract_strided_slice %141 {offsets = [0, 0], sizes = [8, 32], strides = [1, 1]} : vector<8x64xf32> to vector<8x32xf32>
    %143 = vector.extract_strided_slice %141 {offsets = [0, 32], sizes = [8, 32], strides = [1, 1]} : vector<8x64xf32> to vector<8x32xf32>
    %144 = vector.extract_strided_slice %129 {offsets = [0, 64], sizes = [8, 32], strides = [1, 1]} : vector<8x96xf32> to vector<8x32xf32>
    %145 = vector.extract_strided_slice %133 {offsets = [0, 64], sizes = [8, 32], strides = [1, 1]} : vector<8x96xf32> to vector<8x32xf32>
    %146 = arith.mulf %142, %145 : vector<8x32xf32>
    %147 = arith.addf %144, %146 : vector<8x32xf32>
    %148 = math.tanh %147 : vector<8x32xf32>
    %cst_86 = arith.constant 1.000000e+00 : f32
    %149 = vector.broadcast %cst_86 : f32 to vector<8x32xf32>
    %150 = arith.subf %149, %143 : vector<8x32xf32>
    %151 = arith.mulf %150, %148 : vector<8x32xf32>
    %152 = arith.mulf %143, %127 : vector<8x32xf32>
    %153 = arith.addf %151, %152 : vector<8x32xf32>
    %c16_87 = arith.constant 16 : index
    %c0_88 = arith.constant 0 : index
    %154 = vector.load %arg15[%c16_87, %c0_88] : memref<64x32xf32, #tpu.memory_space<vmem>>, vector<8x32xf32>
    tpu.vector_store %arg15[%c16_87, %c0_88], %153 {strides = array<i32>} : memref<64x32xf32, #tpu.memory_space<vmem>>, vector<8x32xf32>,
    %155 = vector.extract_strided_slice %75 {offsets = [24, 0], sizes = [8, 96], strides = [1, 1]} : vector<64x96xf32> to vector<8x96xf32>
    %156 = arith.truncf %153 : vector<8x32xf32> to vector<8x32xbf16>
    %cst_89 = arith.constant dense<0.000000e+00> : vector<8x96xf32>
    %157 = tpu.matmul %156, %68, %cst_89 {dimension_numbers = #tpu.dot_dimension_numbers<[1], [0], [0], [1], [0, 0, 1, 1], [], []>} : vector<8x32xbf16>, vector<32x96xbf16>, vector<8x96xf32> -> vector<8x96xf32>
    %158 = vector.broadcast %70 : vector<1x96xf32> to vector<8x96xf32>
    %159 = arith.addf %157, %158 : vector<8x96xf32>
    %160 = vector.extract_strided_slice %155 {offsets = [0, 0], sizes = [8, 64], strides = [1, 1]} : vector<8x96xf32> to vector<8x64xf32>
    %161 = vector.extract_strided_slice %159 {offsets = [0, 0], sizes = [8, 64], strides = [1, 1]} : vector<8x96xf32> to vector<8x64xf32>
    %162 = arith.addf %160, %161 : vector<8x64xf32>
    %163 = arith.negf %162 : vector<8x64xf32>
    %164 = math.exp %163 : vector<8x64xf32>
    %cst_90 = arith.constant 1.000000e+00 : f32
    %165 = vector.broadcast %cst_90 : f32 to vector<8x64xf32>
    %166 = arith.addf %165, %164 : vector<8x64xf32>
    %167 = arith.divf %165, %166 : vector<8x64xf32>
    %168 = vector.extract_strided_slice %167 {offsets = [0, 0], sizes = [8, 32], strides = [1, 1]} : vector<8x64xf32> to vector<8x32xf32>
    %169 = vector.extract_strided_slice %167 {offsets = [0, 32], sizes = [8, 32], strides = [1, 1]} : vector<8x64xf32> to vector<8x32xf32>
    %170 = vector.extract_strided_slice %155 {offsets = [0, 64], sizes = [8, 32], strides = [1, 1]} : vector<8x96xf32> to vector<8x32xf32>
    %171 = vector.extract_strided_slice %159 {offsets = [0, 64], sizes = [8, 32], strides = [1, 1]} : vector<8x96xf32> to vector<8x32xf32>
    %172 = arith.mulf %168, %171 : vector<8x32xf32>
    %173 = arith.addf %170, %172 : vector<8x32xf32>
    %174 = math.tanh %173 : vector<8x32xf32>
    %cst_91 = arith.constant 1.000000e+00 : f32
    %175 = vector.broadcast %cst_91 : f32 to vector<8x32xf32>
    %176 = arith.subf %175, %169 : vector<8x32xf32>
    %177 = arith.mulf %176, %174 : vector<8x32xf32>
    %178 = arith.mulf %169, %153 : vector<8x32xf32>
    %179 = arith.addf %177, %178 : vector<8x32xf32>
    %c24_92 = arith.constant 24 : index
    %c0_93 = arith.constant 0 : index
    %180 = vector.load %arg15[%c24_92, %c0_93] : memref<64x32xf32, #tpu.memory_space<vmem>>, vector<8x32xf32>
    tpu.vector_store %arg15[%c24_92, %c0_93], %179 {strides = array<i32>} : memref<64x32xf32, #tpu.memory_space<vmem>>, vector<8x32xf32>,
    %181 = vector.extract_strided_slice %75 {offsets = [32, 0], sizes = [8, 96], strides = [1, 1]} : vector<64x96xf32> to vector<8x96xf32>
    %182 = arith.truncf %179 : vector<8x32xf32> to vector<8x32xbf16>
    %cst_94 = arith.constant dense<0.000000e+00> : vector<8x96xf32>
    %183 = tpu.matmul %182, %68, %cst_94 {dimension_numbers = #tpu.dot_dimension_numbers<[1], [0], [0], [1], [0, 0, 1, 1], [], []>} : vector<8x32xbf16>, vector<32x96xbf16>, vector<8x96xf32> -> vector<8x96xf32>
    %184 = vector.broadcast %70 : vector<1x96xf32> to vector<8x96xf32>
    %185 = arith.addf %183, %184 : vector<8x96xf32>
    %186 = vector.extract_strided_slice %181 {offsets = [0, 0], sizes = [8, 64], strides = [1, 1]} : vector<8x96xf32> to vector<8x64xf32>
    %187 = vector.extract_strided_slice %185 {offsets = [0, 0], sizes = [8, 64], strides = [1, 1]} : vector<8x96xf32> to vector<8x64xf32>
    %188 = arith.addf %186, %187 : vector<8x64xf32>
    %189 = arith.negf %188 : vector<8x64xf32>
    %190 = math.exp %189 : vector<8x64xf32>
    %cst_95 = arith.constant 1.000000e+00 : f32
    %191 = vector.broadcast %cst_95 : f32 to vector<8x64xf32>
    %192 = arith.addf %191, %190 : vector<8x64xf32>
    %193 = arith.divf %191, %192 : vector<8x64xf32>
    %194 = vector.extract_strided_slice %193 {offsets = [0, 0], sizes = [8, 32], strides = [1, 1]} : vector<8x64xf32> to vector<8x32xf32>
    %195 = vector.extract_strided_slice %193 {offsets = [0, 32], sizes = [8, 32], strides = [1, 1]} : vector<8x64xf32> to vector<8x32xf32>
    %196 = vector.extract_strided_slice %181 {offsets = [0, 64], sizes = [8, 32], strides = [1, 1]} : vector<8x96xf32> to vector<8x32xf32>
    %197 = vector.extract_strided_slice %185 {offsets = [0, 64], sizes = [8, 32], strides = [1, 1]} : vector<8x96xf32> to vector<8x32xf32>
    %198 = arith.mulf %194, %197 : vector<8x32xf32>
    %199 = arith.addf %196, %198 : vector<8x32xf32>
    %200 = math.tanh %199 : vector<8x32xf32>
    %cst_96 = arith.constant 1.000000e+00 : f32
    %201 = vector.broadcast %cst_96 : f32 to vector<8x32xf32>
    %202 = arith.subf %201, %195 : vector<8x32xf32>
    %203 = arith.mulf %202, %200 : vector<8x32xf32>
    %204 = arith.mulf %195, %179 : vector<8x32xf32>
    %205 = arith.addf %203, %204 : vector<8x32xf32>
    %c32_97 = arith.constant 32 : index
    %c0_98 = arith.constant 0 : index
    %206 = vector.load %arg15[%c32_97, %c0_98] : memref<64x32xf32, #tpu.memory_space<vmem>>, vector<8x32xf32>
    tpu.vector_store %arg15[%c32_97, %c0_98], %205 {strides = array<i32>} : memref<64x32xf32, #tpu.memory_space<vmem>>, vector<8x32xf32>,
    %207 = vector.extract_strided_slice %75 {offsets = [40, 0], sizes = [8, 96], strides = [1, 1]} : vector<64x96xf32> to vector<8x96xf32>
    %208 = arith.truncf %205 : vector<8x32xf32> to vector<8x32xbf16>
    %cst_99 = arith.constant dense<0.000000e+00> : vector<8x96xf32>
    %209 = tpu.matmul %208, %68, %cst_99 {dimension_numbers = #tpu.dot_dimension_numbers<[1], [0], [0], [1], [0, 0, 1, 1], [], []>} : vector<8x32xbf16>, vector<32x96xbf16>, vector<8x96xf32> -> vector<8x96xf32>
    %210 = vector.broadcast %70 : vector<1x96xf32> to vector<8x96xf32>
    %211 = arith.addf %209, %210 : vector<8x96xf32>
    %212 = vector.extract_strided_slice %207 {offsets = [0, 0], sizes = [8, 64], strides = [1, 1]} : vector<8x96xf32> to vector<8x64xf32>
    %213 = vector.extract_strided_slice %211 {offsets = [0, 0], sizes = [8, 64], strides = [1, 1]} : vector<8x96xf32> to vector<8x64xf32>
    %214 = arith.addf %212, %213 : vector<8x64xf32>
    %215 = arith.negf %214 : vector<8x64xf32>
    %216 = math.exp %215 : vector<8x64xf32>
    %cst_100 = arith.constant 1.000000e+00 : f32
    %217 = vector.broadcast %cst_100 : f32 to vector<8x64xf32>
    %218 = arith.addf %217, %216 : vector<8x64xf32>
    %219 = arith.divf %217, %218 : vector<8x64xf32>
    %220 = vector.extract_strided_slice %219 {offsets = [0, 0], sizes = [8, 32], strides = [1, 1]} : vector<8x64xf32> to vector<8x32xf32>
    %221 = vector.extract_strided_slice %219 {offsets = [0, 32], sizes = [8, 32], strides = [1, 1]} : vector<8x64xf32> to vector<8x32xf32>
    %222 = vector.extract_strided_slice %207 {offsets = [0, 64], sizes = [8, 32], strides = [1, 1]} : vector<8x96xf32> to vector<8x32xf32>
    %223 = vector.extract_strided_slice %211 {offsets = [0, 64], sizes = [8, 32], strides = [1, 1]} : vector<8x96xf32> to vector<8x32xf32>
    %224 = arith.mulf %220, %223 : vector<8x32xf32>
    %225 = arith.addf %222, %224 : vector<8x32xf32>
    %226 = math.tanh %225 : vector<8x32xf32>
    %cst_101 = arith.constant 1.000000e+00 : f32
    %227 = vector.broadcast %cst_101 : f32 to vector<8x32xf32>
    %228 = arith.subf %227, %221 : vector<8x32xf32>
    %229 = arith.mulf %228, %226 : vector<8x32xf32>
    %230 = arith.mulf %221, %205 : vector<8x32xf32>
    %231 = arith.addf %229, %230 : vector<8x32xf32>
    %c40_102 = arith.constant 40 : index
    %c0_103 = arith.constant 0 : index
    %232 = vector.load %arg15[%c40_102, %c0_103] : memref<64x32xf32, #tpu.memory_space<vmem>>, vector<8x32xf32>
    tpu.vector_store %arg15[%c40_102, %c0_103], %231 {strides = array<i32>} : memref<64x32xf32, #tpu.memory_space<vmem>>, vector<8x32xf32>,
    %233 = vector.extract_strided_slice %75 {offsets = [48, 0], sizes = [8, 96], strides = [1, 1]} : vector<64x96xf32> to vector<8x96xf32>
    %234 = arith.truncf %231 : vector<8x32xf32> to vector<8x32xbf16>
    %cst_104 = arith.constant dense<0.000000e+00> : vector<8x96xf32>
    %235 = tpu.matmul %234, %68, %cst_104 {dimension_numbers = #tpu.dot_dimension_numbers<[1], [0], [0], [1], [0, 0, 1, 1], [], []>} : vector<8x32xbf16>, vector<32x96xbf16>, vector<8x96xf32> -> vector<8x96xf32>
    %236 = vector.broadcast %70 : vector<1x96xf32> to vector<8x96xf32>
    %237 = arith.addf %235, %236 : vector<8x96xf32>
    %238 = vector.extract_strided_slice %233 {offsets = [0, 0], sizes = [8, 64], strides = [1, 1]} : vector<8x96xf32> to vector<8x64xf32>
    %239 = vector.extract_strided_slice %237 {offsets = [0, 0], sizes = [8, 64], strides = [1, 1]} : vector<8x96xf32> to vector<8x64xf32>
    %240 = arith.addf %238, %239 : vector<8x64xf32>
    %241 = arith.negf %240 : vector<8x64xf32>
    %242 = math.exp %241 : vector<8x64xf32>
    %cst_105 = arith.constant 1.000000e+00 : f32
    %243 = vector.broadcast %cst_105 : f32 to vector<8x64xf32>
    %244 = arith.addf %243, %242 : vector<8x64xf32>
    %245 = arith.divf %243, %244 : vector<8x64xf32>
    %246 = vector.extract_strided_slice %245 {offsets = [0, 0], sizes = [8, 32], strides = [1, 1]} : vector<8x64xf32> to vector<8x32xf32>
    %247 = vector.extract_strided_slice %245 {offsets = [0, 32], sizes = [8, 32], strides = [1, 1]} : vector<8x64xf32> to vector<8x32xf32>
    %248 = vector.extract_strided_slice %233 {offsets = [0, 64], sizes = [8, 32], strides = [1, 1]} : vector<8x96xf32> to vector<8x32xf32>
    %249 = vector.extract_strided_slice %237 {offsets = [0, 64], sizes = [8, 32], strides = [1, 1]} : vector<8x96xf32> to vector<8x32xf32>
    %250 = arith.mulf %246, %249 : vector<8x32xf32>
    %251 = arith.addf %248, %250 : vector<8x32xf32>
    %252 = math.tanh %251 : vector<8x32xf32>
    %cst_106 = arith.constant 1.000000e+00 : f32
    %253 = vector.broadcast %cst_106 : f32 to vector<8x32xf32>
    %254 = arith.subf %253, %247 : vector<8x32xf32>
    %255 = arith.mulf %254, %252 : vector<8x32xf32>
    %256 = arith.mulf %247, %231 : vector<8x32xf32>
    %257 = arith.addf %255, %256 : vector<8x32xf32>
    %c48_107 = arith.constant 48 : index
    %c0_108 = arith.constant 0 : index
    %258 = vector.load %arg15[%c48_107, %c0_108] : memref<64x32xf32, #tpu.memory_space<vmem>>, vector<8x32xf32>
    tpu.vector_store %arg15[%c48_107, %c0_108], %257 {strides = array<i32>} : memref<64x32xf32, #tpu.memory_space<vmem>>, vector<8x32xf32>,
    %259 = vector.extract_strided_slice %75 {offsets = [56, 0], sizes = [8, 96], strides = [1, 1]} : vector<64x96xf32> to vector<8x96xf32>
    %260 = arith.truncf %257 : vector<8x32xf32> to vector<8x32xbf16>
    %cst_109 = arith.constant dense<0.000000e+00> : vector<8x96xf32>
    %261 = tpu.matmul %260, %68, %cst_109 {dimension_numbers = #tpu.dot_dimension_numbers<[1], [0], [0], [1], [0, 0, 1, 1], [], []>} : vector<8x32xbf16>, vector<32x96xbf16>, vector<8x96xf32> -> vector<8x96xf32>
    %262 = vector.broadcast %70 : vector<1x96xf32> to vector<8x96xf32>
    %263 = arith.addf %261, %262 : vector<8x96xf32>
    %264 = vector.extract_strided_slice %259 {offsets = [0, 0], sizes = [8, 64], strides = [1, 1]} : vector<8x96xf32> to vector<8x64xf32>
    %265 = vector.extract_strided_slice %263 {offsets = [0, 0], sizes = [8, 64], strides = [1, 1]} : vector<8x96xf32> to vector<8x64xf32>
    %266 = arith.addf %264, %265 : vector<8x64xf32>
    %267 = arith.negf %266 : vector<8x64xf32>
    %268 = math.exp %267 : vector<8x64xf32>
    %cst_110 = arith.constant 1.000000e+00 : f32
    %269 = vector.broadcast %cst_110 : f32 to vector<8x64xf32>
    %270 = arith.addf %269, %268 : vector<8x64xf32>
    %271 = arith.divf %269, %270 : vector<8x64xf32>
    %272 = vector.extract_strided_slice %271 {offsets = [0, 0], sizes = [8, 32], strides = [1, 1]} : vector<8x64xf32> to vector<8x32xf32>
    %273 = vector.extract_strided_slice %271 {offsets = [0, 32], sizes = [8, 32], strides = [1, 1]} : vector<8x64xf32> to vector<8x32xf32>
    %274 = vector.extract_strided_slice %259 {offsets = [0, 64], sizes = [8, 32], strides = [1, 1]} : vector<8x96xf32> to vector<8x32xf32>
    %275 = vector.extract_strided_slice %263 {offsets = [0, 64], sizes = [8, 32], strides = [1, 1]} : vector<8x96xf32> to vector<8x32xf32>
    %276 = arith.mulf %272, %275 : vector<8x32xf32>
    %277 = arith.addf %274, %276 : vector<8x32xf32>
    %278 = math.tanh %277 : vector<8x32xf32>
    %cst_111 = arith.constant 1.000000e+00 : f32
    %279 = vector.broadcast %cst_111 : f32 to vector<8x32xf32>
    %280 = arith.subf %279, %273 : vector<8x32xf32>
    %281 = arith.mulf %280, %278 : vector<8x32xf32>
    %282 = arith.mulf %273, %257 : vector<8x32xf32>
    %283 = arith.addf %281, %282 : vector<8x32xf32>
    %c56_112 = arith.constant 56 : index
    %c0_113 = arith.constant 0 : index
    %284 = vector.load %arg15[%c56_112, %c0_113] : memref<64x32xf32, #tpu.memory_space<vmem>>, vector<8x32xf32>
    tpu.vector_store %arg15[%c56_112, %c0_113], %283 {strides = array<i32>} : memref<64x32xf32, #tpu.memory_space<vmem>>, vector<8x32xf32>,
    %c0_114 = arith.constant 0 : index
    %c0_115 = arith.constant 0 : index
    %285 = vector.load %arg7[%c0_114, %c0_115] : memref<32x96xbf16, #tpu.memory_space<vmem>>, vector<32x96xbf16>
    %c0_116 = arith.constant 0 : index
    %c0_117 = arith.constant 0 : index
    %286 = vector.load %arg8[%c0_116, %c0_117] : memref<32x96xbf16, #tpu.memory_space<vmem>>, vector<32x96xbf16>
    %c0_118 = arith.constant 0 : index
    %c0_119 = arith.constant 0 : index
    %287 = vector.load %arg9[%c0_118, %c0_119] : memref<1x96xf32, #tpu.memory_space<vmem>>, vector<1x96xf32>
    %c0_120 = arith.constant 0 : index
    %c0_121 = arith.constant 0 : index
    %288 = vector.load %arg10[%c0_120, %c0_121] : memref<1x96xf32, #tpu.memory_space<vmem>>, vector<1x96xf32>
    %c0_122 = arith.constant 0 : index
    %c0_123 = arith.constant 0 : index
    %289 = vector.load %arg15[%c0_122, %c0_123] : memref<64x32xf32, #tpu.memory_space<vmem>>, vector<64x32xf32>
    %290 = arith.truncf %289 : vector<64x32xf32> to vector<64x32xbf16>
    %cst_124 = arith.constant dense<0.000000e+00> : vector<64x96xf32>
    %291 = tpu.matmul %290, %285, %cst_124 {dimension_numbers = #tpu.dot_dimension_numbers<[1], [0], [0], [1], [0, 0, 1, 1], [], []>} : vector<64x32xbf16>, vector<32x96xbf16>, vector<64x96xf32> -> vector<64x96xf32>
    %292 = vector.broadcast %287 : vector<1x96xf32> to vector<64x96xf32>
    %293 = arith.addf %291, %292 : vector<64x96xf32>
    %cst_125 = arith.constant 0.000000e+00 : f32
    %294 = vector.broadcast %cst_125 : f32 to vector<8x32xf32>
    %295 = vector.extract_strided_slice %293 {offsets = [0, 0], sizes = [8, 96], strides = [1, 1]} : vector<64x96xf32> to vector<8x96xf32>
    %296 = arith.truncf %294 : vector<8x32xf32> to vector<8x32xbf16>
    %cst_126 = arith.constant dense<0.000000e+00> : vector<8x96xf32>
    %297 = tpu.matmul %296, %286, %cst_126 {dimension_numbers = #tpu.dot_dimension_numbers<[1], [0], [0], [1], [0, 0, 1, 1], [], []>} : vector<8x32xbf16>, vector<32x96xbf16>, vector<8x96xf32> -> vector<8x96xf32>
    %298 = vector.broadcast %288 : vector<1x96xf32> to vector<8x96xf32>
    %299 = arith.addf %297, %298 : vector<8x96xf32>
    %300 = vector.extract_strided_slice %295 {offsets = [0, 0], sizes = [8, 64], strides = [1, 1]} : vector<8x96xf32> to vector<8x64xf32>
    %301 = vector.extract_strided_slice %299 {offsets = [0, 0], sizes = [8, 64], strides = [1, 1]} : vector<8x96xf32> to vector<8x64xf32>
    %302 = arith.addf %300, %301 : vector<8x64xf32>
    %303 = arith.negf %302 : vector<8x64xf32>
    %304 = math.exp %303 : vector<8x64xf32>
    %cst_127 = arith.constant 1.000000e+00 : f32
    %305 = vector.broadcast %cst_127 : f32 to vector<8x64xf32>
    %306 = arith.addf %305, %304 : vector<8x64xf32>
    %307 = arith.divf %305, %306 : vector<8x64xf32>
    %308 = vector.extract_strided_slice %307 {offsets = [0, 0], sizes = [8, 32], strides = [1, 1]} : vector<8x64xf32> to vector<8x32xf32>
    %309 = vector.extract_strided_slice %307 {offsets = [0, 32], sizes = [8, 32], strides = [1, 1]} : vector<8x64xf32> to vector<8x32xf32>
    %310 = vector.extract_strided_slice %295 {offsets = [0, 64], sizes = [8, 32], strides = [1, 1]} : vector<8x96xf32> to vector<8x32xf32>
    %311 = vector.extract_strided_slice %299 {offsets = [0, 64], sizes = [8, 32], strides = [1, 1]} : vector<8x96xf32> to vector<8x32xf32>
    %312 = arith.mulf %308, %311 : vector<8x32xf32>
    %313 = arith.addf %310, %312 : vector<8x32xf32>
    %314 = math.tanh %313 : vector<8x32xf32>
    %cst_128 = arith.constant 1.000000e+00 : f32
    %315 = vector.broadcast %cst_128 : f32 to vector<8x32xf32>
    %316 = arith.subf %315, %309 : vector<8x32xf32>
    %317 = arith.mulf %316, %314 : vector<8x32xf32>
    %318 = arith.mulf %309, %294 : vector<8x32xf32>
    %319 = arith.addf %317, %318 : vector<8x32xf32>
    %320 = vector.broadcast %66 : vector<1x32xf32> to vector<8x32xf32>
    %321 = arith.mulf %319, %320 : vector<8x32xf32>
    %cst_129 = arith.constant dense<0.000000e+00> : vector<8xf32>
    %322 = vector.multi_reduction <add>, %321, %cst_129 [1] : vector<8x32xf32> to vector<8xf32>
    %323 = vector.shape_cast %322 : vector<8xf32> to vector<8x1xf32>
    %324 = vector.extract_strided_slice %293 {offsets = [8, 0], sizes = [8, 96], strides = [1, 1]} : vector<64x96xf32> to vector<8x96xf32>
    %325 = arith.truncf %319 : vector<8x32xf32> to vector<8x32xbf16>
    %cst_130 = arith.constant dense<0.000000e+00> : vector<8x96xf32>
    %326 = tpu.matmul %325, %286, %cst_130 {dimension_numbers = #tpu.dot_dimension_numbers<[1], [0], [0], [1], [0, 0, 1, 1], [], []>} : vector<8x32xbf16>, vector<32x96xbf16>, vector<8x96xf32> -> vector<8x96xf32>
    %327 = vector.broadcast %288 : vector<1x96xf32> to vector<8x96xf32>
    %328 = arith.addf %326, %327 : vector<8x96xf32>
    %329 = vector.extract_strided_slice %324 {offsets = [0, 0], sizes = [8, 64], strides = [1, 1]} : vector<8x96xf32> to vector<8x64xf32>
    %330 = vector.extract_strided_slice %328 {offsets = [0, 0], sizes = [8, 64], strides = [1, 1]} : vector<8x96xf32> to vector<8x64xf32>
    %331 = arith.addf %329, %330 : vector<8x64xf32>
    %332 = arith.negf %331 : vector<8x64xf32>
    %333 = math.exp %332 : vector<8x64xf32>
    %cst_131 = arith.constant 1.000000e+00 : f32
    %334 = vector.broadcast %cst_131 : f32 to vector<8x64xf32>
    %335 = arith.addf %334, %333 : vector<8x64xf32>
    %336 = arith.divf %334, %335 : vector<8x64xf32>
    %337 = vector.extract_strided_slice %336 {offsets = [0, 0], sizes = [8, 32], strides = [1, 1]} : vector<8x64xf32> to vector<8x32xf32>
    %338 = vector.extract_strided_slice %336 {offsets = [0, 32], sizes = [8, 32], strides = [1, 1]} : vector<8x64xf32> to vector<8x32xf32>
    %339 = vector.extract_strided_slice %324 {offsets = [0, 64], sizes = [8, 32], strides = [1, 1]} : vector<8x96xf32> to vector<8x32xf32>
    %340 = vector.extract_strided_slice %328 {offsets = [0, 64], sizes = [8, 32], strides = [1, 1]} : vector<8x96xf32> to vector<8x32xf32>
    %341 = arith.mulf %337, %340 : vector<8x32xf32>
    %342 = arith.addf %339, %341 : vector<8x32xf32>
    %343 = math.tanh %342 : vector<8x32xf32>
    %cst_132 = arith.constant 1.000000e+00 : f32
    %344 = vector.broadcast %cst_132 : f32 to vector<8x32xf32>
    %345 = arith.subf %344, %338 : vector<8x32xf32>
    %346 = arith.mulf %345, %343 : vector<8x32xf32>
    %347 = arith.mulf %338, %319 : vector<8x32xf32>
    %348 = arith.addf %346, %347 : vector<8x32xf32>
    %349 = vector.broadcast %66 : vector<1x32xf32> to vector<8x32xf32>
    %350 = arith.mulf %348, %349 : vector<8x32xf32>
    %cst_133 = arith.constant dense<0.000000e+00> : vector<8xf32>
    %351 = vector.multi_reduction <add>, %350, %cst_133 [1] : vector<8x32xf32> to vector<8xf32>
    %352 = vector.shape_cast %351 : vector<8xf32> to vector<8x1xf32>
    %353 = vector.extract_strided_slice %293 {offsets = [16, 0], sizes = [8, 96], strides = [1, 1]} : vector<64x96xf32> to vector<8x96xf32>
    %354 = arith.truncf %348 : vector<8x32xf32> to vector<8x32xbf16>
    %cst_134 = arith.constant dense<0.000000e+00> : vector<8x96xf32>
    %355 = tpu.matmul %354, %286, %cst_134 {dimension_numbers = #tpu.dot_dimension_numbers<[1], [0], [0], [1], [0, 0, 1, 1], [], []>} : vector<8x32xbf16>, vector<32x96xbf16>, vector<8x96xf32> -> vector<8x96xf32>
    %356 = vector.broadcast %288 : vector<1x96xf32> to vector<8x96xf32>
    %357 = arith.addf %355, %356 : vector<8x96xf32>
    %358 = vector.extract_strided_slice %353 {offsets = [0, 0], sizes = [8, 64], strides = [1, 1]} : vector<8x96xf32> to vector<8x64xf32>
    %359 = vector.extract_strided_slice %357 {offsets = [0, 0], sizes = [8, 64], strides = [1, 1]} : vector<8x96xf32> to vector<8x64xf32>
    %360 = arith.addf %358, %359 : vector<8x64xf32>
    %361 = arith.negf %360 : vector<8x64xf32>
    %362 = math.exp %361 : vector<8x64xf32>
    %cst_135 = arith.constant 1.000000e+00 : f32
    %363 = vector.broadcast %cst_135 : f32 to vector<8x64xf32>
    %364 = arith.addf %363, %362 : vector<8x64xf32>
    %365 = arith.divf %363, %364 : vector<8x64xf32>
    %366 = vector.extract_strided_slice %365 {offsets = [0, 0], sizes = [8, 32], strides = [1, 1]} : vector<8x64xf32> to vector<8x32xf32>
    %367 = vector.extract_strided_slice %365 {offsets = [0, 32], sizes = [8, 32], strides = [1, 1]} : vector<8x64xf32> to vector<8x32xf32>
    %368 = vector.extract_strided_slice %353 {offsets = [0, 64], sizes = [8, 32], strides = [1, 1]} : vector<8x96xf32> to vector<8x32xf32>
    %369 = vector.extract_strided_slice %357 {offsets = [0, 64], sizes = [8, 32], strides = [1, 1]} : vector<8x96xf32> to vector<8x32xf32>
    %370 = arith.mulf %366, %369 : vector<8x32xf32>
    %371 = arith.addf %368, %370 : vector<8x32xf32>
    %372 = math.tanh %371 : vector<8x32xf32>
    %cst_136 = arith.constant 1.000000e+00 : f32
    %373 = vector.broadcast %cst_136 : f32 to vector<8x32xf32>
    %374 = arith.subf %373, %367 : vector<8x32xf32>
    %375 = arith.mulf %374, %372 : vector<8x32xf32>
    %376 = arith.mulf %367, %348 : vector<8x32xf32>
    %377 = arith.addf %375, %376 : vector<8x32xf32>
    %378 = vector.broadcast %66 : vector<1x32xf32> to vector<8x32xf32>
    %379 = arith.mulf %377, %378 : vector<8x32xf32>
    %cst_137 = arith.constant dense<0.000000e+00> : vector<8xf32>
    %380 = vector.multi_reduction <add>, %379, %cst_137 [1] : vector<8x32xf32> to vector<8xf32>
    %381 = vector.shape_cast %380 : vector<8xf32> to vector<8x1xf32>
    %382 = vector.extract_strided_slice %293 {offsets = [24, 0], sizes = [8, 96], strides = [1, 1]} : vector<64x96xf32> to vector<8x96xf32>
    %383 = arith.truncf %377 : vector<8x32xf32> to vector<8x32xbf16>
    %cst_138 = arith.constant dense<0.000000e+00> : vector<8x96xf32>
    %384 = tpu.matmul %383, %286, %cst_138 {dimension_numbers = #tpu.dot_dimension_numbers<[1], [0], [0], [1], [0, 0, 1, 1], [], []>} : vector<8x32xbf16>, vector<32x96xbf16>, vector<8x96xf32> -> vector<8x96xf32>
    %385 = vector.broadcast %288 : vector<1x96xf32> to vector<8x96xf32>
    %386 = arith.addf %384, %385 : vector<8x96xf32>
    %387 = vector.extract_strided_slice %382 {offsets = [0, 0], sizes = [8, 64], strides = [1, 1]} : vector<8x96xf32> to vector<8x64xf32>
    %388 = vector.extract_strided_slice %386 {offsets = [0, 0], sizes = [8, 64], strides = [1, 1]} : vector<8x96xf32> to vector<8x64xf32>
    %389 = arith.addf %387, %388 : vector<8x64xf32>
    %390 = arith.negf %389 : vector<8x64xf32>
    %391 = math.exp %390 : vector<8x64xf32>
    %cst_139 = arith.constant 1.000000e+00 : f32
    %392 = vector.broadcast %cst_139 : f32 to vector<8x64xf32>
    %393 = arith.addf %392, %391 : vector<8x64xf32>
    %394 = arith.divf %392, %393 : vector<8x64xf32>
    %395 = vector.extract_strided_slice %394 {offsets = [0, 0], sizes = [8, 32], strides = [1, 1]} : vector<8x64xf32> to vector<8x32xf32>
    %396 = vector.extract_strided_slice %394 {offsets = [0, 32], sizes = [8, 32], strides = [1, 1]} : vector<8x64xf32> to vector<8x32xf32>
    %397 = vector.extract_strided_slice %382 {offsets = [0, 64], sizes = [8, 32], strides = [1, 1]} : vector<8x96xf32> to vector<8x32xf32>
    %398 = vector.extract_strided_slice %386 {offsets = [0, 64], sizes = [8, 32], strides = [1, 1]} : vector<8x96xf32> to vector<8x32xf32>
    %399 = arith.mulf %395, %398 : vector<8x32xf32>
    %400 = arith.addf %397, %399 : vector<8x32xf32>
    %401 = math.tanh %400 : vector<8x32xf32>
    %cst_140 = arith.constant 1.000000e+00 : f32
    %402 = vector.broadcast %cst_140 : f32 to vector<8x32xf32>
    %403 = arith.subf %402, %396 : vector<8x32xf32>
    %404 = arith.mulf %403, %401 : vector<8x32xf32>
    %405 = arith.mulf %396, %377 : vector<8x32xf32>
    %406 = arith.addf %404, %405 : vector<8x32xf32>
    %407 = vector.broadcast %66 : vector<1x32xf32> to vector<8x32xf32>
    %408 = arith.mulf %406, %407 : vector<8x32xf32>
    %cst_141 = arith.constant dense<0.000000e+00> : vector<8xf32>
    %409 = vector.multi_reduction <add>, %408, %cst_141 [1] : vector<8x32xf32> to vector<8xf32>
    %410 = vector.shape_cast %409 : vector<8xf32> to vector<8x1xf32>
    %411 = vector.extract_strided_slice %293 {offsets = [32, 0], sizes = [8, 96], strides = [1, 1]} : vector<64x96xf32> to vector<8x96xf32>
    %412 = arith.truncf %406 : vector<8x32xf32> to vector<8x32xbf16>
    %cst_142 = arith.constant dense<0.000000e+00> : vector<8x96xf32>
    %413 = tpu.matmul %412, %286, %cst_142 {dimension_numbers = #tpu.dot_dimension_numbers<[1], [0], [0], [1], [0, 0, 1, 1], [], []>} : vector<8x32xbf16>, vector<32x96xbf16>, vector<8x96xf32> -> vector<8x96xf32>
    %414 = vector.broadcast %288 : vector<1x96xf32> to vector<8x96xf32>
    %415 = arith.addf %413, %414 : vector<8x96xf32>
    %416 = vector.extract_strided_slice %411 {offsets = [0, 0], sizes = [8, 64], strides = [1, 1]} : vector<8x96xf32> to vector<8x64xf32>
    %417 = vector.extract_strided_slice %415 {offsets = [0, 0], sizes = [8, 64], strides = [1, 1]} : vector<8x96xf32> to vector<8x64xf32>
    %418 = arith.addf %416, %417 : vector<8x64xf32>
    %419 = arith.negf %418 : vector<8x64xf32>
    %420 = math.exp %419 : vector<8x64xf32>
    %cst_143 = arith.constant 1.000000e+00 : f32
    %421 = vector.broadcast %cst_143 : f32 to vector<8x64xf32>
    %422 = arith.addf %421, %420 : vector<8x64xf32>
    %423 = arith.divf %421, %422 : vector<8x64xf32>
    %424 = vector.extract_strided_slice %423 {offsets = [0, 0], sizes = [8, 32], strides = [1, 1]} : vector<8x64xf32> to vector<8x32xf32>
    %425 = vector.extract_strided_slice %423 {offsets = [0, 32], sizes = [8, 32], strides = [1, 1]} : vector<8x64xf32> to vector<8x32xf32>
    %426 = vector.extract_strided_slice %411 {offsets = [0, 64], sizes = [8, 32], strides = [1, 1]} : vector<8x96xf32> to vector<8x32xf32>
    %427 = vector.extract_strided_slice %415 {offsets = [0, 64], sizes = [8, 32], strides = [1, 1]} : vector<8x96xf32> to vector<8x32xf32>
    %428 = arith.mulf %424, %427 : vector<8x32xf32>
    %429 = arith.addf %426, %428 : vector<8x32xf32>
    %430 = math.tanh %429 : vector<8x32xf32>
    %cst_144 = arith.constant 1.000000e+00 : f32
    %431 = vector.broadcast %cst_144 : f32 to vector<8x32xf32>
    %432 = arith.subf %431, %425 : vector<8x32xf32>
    %433 = arith.mulf %432, %430 : vector<8x32xf32>
    %434 = arith.mulf %425, %406 : vector<8x32xf32>
    %435 = arith.addf %433, %434 : vector<8x32xf32>
    %436 = vector.broadcast %66 : vector<1x32xf32> to vector<8x32xf32>
    %437 = arith.mulf %435, %436 : vector<8x32xf32>
    %cst_145 = arith.constant dense<0.000000e+00> : vector<8xf32>
    %438 = vector.multi_reduction <add>, %437, %cst_145 [1] : vector<8x32xf32> to vector<8xf32>
    %439 = vector.shape_cast %438 : vector<8xf32> to vector<8x1xf32>
    %440 = vector.extract_strided_slice %293 {offsets = [40, 0], sizes = [8, 96], strides = [1, 1]} : vector<64x96xf32> to vector<8x96xf32>
    %441 = arith.truncf %435 : vector<8x32xf32> to vector<8x32xbf16>
    %cst_146 = arith.constant dense<0.000000e+00> : vector<8x96xf32>
    %442 = tpu.matmul %441, %286, %cst_146 {dimension_numbers = #tpu.dot_dimension_numbers<[1], [0], [0], [1], [0, 0, 1, 1], [], []>} : vector<8x32xbf16>, vector<32x96xbf16>, vector<8x96xf32> -> vector<8x96xf32>
    %443 = vector.broadcast %288 : vector<1x96xf32> to vector<8x96xf32>
    %444 = arith.addf %442, %443 : vector<8x96xf32>
    %445 = vector.extract_strided_slice %440 {offsets = [0, 0], sizes = [8, 64], strides = [1, 1]} : vector<8x96xf32> to vector<8x64xf32>
    %446 = vector.extract_strided_slice %444 {offsets = [0, 0], sizes = [8, 64], strides = [1, 1]} : vector<8x96xf32> to vector<8x64xf32>
    %447 = arith.addf %445, %446 : vector<8x64xf32>
    %448 = arith.negf %447 : vector<8x64xf32>
    %449 = math.exp %448 : vector<8x64xf32>
    %cst_147 = arith.constant 1.000000e+00 : f32
    %450 = vector.broadcast %cst_147 : f32 to vector<8x64xf32>
    %451 = arith.addf %450, %449 : vector<8x64xf32>
    %452 = arith.divf %450, %451 : vector<8x64xf32>
    %453 = vector.extract_strided_slice %452 {offsets = [0, 0], sizes = [8, 32], strides = [1, 1]} : vector<8x64xf32> to vector<8x32xf32>
    %454 = vector.extract_strided_slice %452 {offsets = [0, 32], sizes = [8, 32], strides = [1, 1]} : vector<8x64xf32> to vector<8x32xf32>
    %455 = vector.extract_strided_slice %440 {offsets = [0, 64], sizes = [8, 32], strides = [1, 1]} : vector<8x96xf32> to vector<8x32xf32>
    %456 = vector.extract_strided_slice %444 {offsets = [0, 64], sizes = [8, 32], strides = [1, 1]} : vector<8x96xf32> to vector<8x32xf32>
    %457 = arith.mulf %453, %456 : vector<8x32xf32>
    %458 = arith.addf %455, %457 : vector<8x32xf32>
    %459 = math.tanh %458 : vector<8x32xf32>
    %cst_148 = arith.constant 1.000000e+00 : f32
    %460 = vector.broadcast %cst_148 : f32 to vector<8x32xf32>
    %461 = arith.subf %460, %454 : vector<8x32xf32>
    %462 = arith.mulf %461, %459 : vector<8x32xf32>
    %463 = arith.mulf %454, %435 : vector<8x32xf32>
    %464 = arith.addf %462, %463 : vector<8x32xf32>
    %465 = vector.broadcast %66 : vector<1x32xf32> to vector<8x32xf32>
    %466 = arith.mulf %464, %465 : vector<8x32xf32>
    %cst_149 = arith.constant dense<0.000000e+00> : vector<8xf32>
    %467 = vector.multi_reduction <add>, %466, %cst_149 [1] : vector<8x32xf32> to vector<8xf32>
    %468 = vector.shape_cast %467 : vector<8xf32> to vector<8x1xf32>
    %469 = vector.extract_strided_slice %293 {offsets = [48, 0], sizes = [8, 96], strides = [1, 1]} : vector<64x96xf32> to vector<8x96xf32>
    %470 = arith.truncf %464 : vector<8x32xf32> to vector<8x32xbf16>
    %cst_150 = arith.constant dense<0.000000e+00> : vector<8x96xf32>
    %471 = tpu.matmul %470, %286, %cst_150 {dimension_numbers = #tpu.dot_dimension_numbers<[1], [0], [0], [1], [0, 0, 1, 1], [], []>} : vector<8x32xbf16>, vector<32x96xbf16>, vector<8x96xf32> -> vector<8x96xf32>
    %472 = vector.broadcast %288 : vector<1x96xf32> to vector<8x96xf32>
    %473 = arith.addf %471, %472 : vector<8x96xf32>
    %474 = vector.extract_strided_slice %469 {offsets = [0, 0], sizes = [8, 64], strides = [1, 1]} : vector<8x96xf32> to vector<8x64xf32>
    %475 = vector.extract_strided_slice %473 {offsets = [0, 0], sizes = [8, 64], strides = [1, 1]} : vector<8x96xf32> to vector<8x64xf32>
    %476 = arith.addf %474, %475 : vector<8x64xf32>
    %477 = arith.negf %476 : vector<8x64xf32>
    %478 = math.exp %477 : vector<8x64xf32>
    %cst_151 = arith.constant 1.000000e+00 : f32
    %479 = vector.broadcast %cst_151 : f32 to vector<8x64xf32>
    %480 = arith.addf %479, %478 : vector<8x64xf32>
    %481 = arith.divf %479, %480 : vector<8x64xf32>
    %482 = vector.extract_strided_slice %481 {offsets = [0, 0], sizes = [8, 32], strides = [1, 1]} : vector<8x64xf32> to vector<8x32xf32>
    %483 = vector.extract_strided_slice %481 {offsets = [0, 32], sizes = [8, 32], strides = [1, 1]} : vector<8x64xf32> to vector<8x32xf32>
    %484 = vector.extract_strided_slice %469 {offsets = [0, 64], sizes = [8, 32], strides = [1, 1]} : vector<8x96xf32> to vector<8x32xf32>
    %485 = vector.extract_strided_slice %473 {offsets = [0, 64], sizes = [8, 32], strides = [1, 1]} : vector<8x96xf32> to vector<8x32xf32>
    %486 = arith.mulf %482, %485 : vector<8x32xf32>
    %487 = arith.addf %484, %486 : vector<8x32xf32>
    %488 = math.tanh %487 : vector<8x32xf32>
    %cst_152 = arith.constant 1.000000e+00 : f32
    %489 = vector.broadcast %cst_152 : f32 to vector<8x32xf32>
    %490 = arith.subf %489, %483 : vector<8x32xf32>
    %491 = arith.mulf %490, %488 : vector<8x32xf32>
    %492 = arith.mulf %483, %464 : vector<8x32xf32>
    %493 = arith.addf %491, %492 : vector<8x32xf32>
    %494 = vector.broadcast %66 : vector<1x32xf32> to vector<8x32xf32>
    %495 = arith.mulf %493, %494 : vector<8x32xf32>
    %cst_153 = arith.constant dense<0.000000e+00> : vector<8xf32>
    %496 = vector.multi_reduction <add>, %495, %cst_153 [1] : vector<8x32xf32> to vector<8xf32>
    %497 = vector.shape_cast %496 : vector<8xf32> to vector<8x1xf32>
    %498 = vector.extract_strided_slice %293 {offsets = [56, 0], sizes = [8, 96], strides = [1, 1]} : vector<64x96xf32> to vector<8x96xf32>
    %499 = arith.truncf %493 : vector<8x32xf32> to vector<8x32xbf16>
    %cst_154 = arith.constant dense<0.000000e+00> : vector<8x96xf32>
    %500 = tpu.matmul %499, %286, %cst_154 {dimension_numbers = #tpu.dot_dimension_numbers<[1], [0], [0], [1], [0, 0, 1, 1], [], []>} : vector<8x32xbf16>, vector<32x96xbf16>, vector<8x96xf32> -> vector<8x96xf32>
    %501 = vector.broadcast %288 : vector<1x96xf32> to vector<8x96xf32>
    %502 = arith.addf %500, %501 : vector<8x96xf32>
    %503 = vector.extract_strided_slice %498 {offsets = [0, 0], sizes = [8, 64], strides = [1, 1]} : vector<8x96xf32> to vector<8x64xf32>
    %504 = vector.extract_strided_slice %502 {offsets = [0, 0], sizes = [8, 64], strides = [1, 1]} : vector<8x96xf32> to vector<8x64xf32>
    %505 = arith.addf %503, %504 : vector<8x64xf32>
    %506 = arith.negf %505 : vector<8x64xf32>
    %507 = math.exp %506 : vector<8x64xf32>
    %cst_155 = arith.constant 1.000000e+00 : f32
    %508 = vector.broadcast %cst_155 : f32 to vector<8x64xf32>
    %509 = arith.addf %508, %507 : vector<8x64xf32>
    %510 = arith.divf %508, %509 : vector<8x64xf32>
    %511 = vector.extract_strided_slice %510 {offsets = [0, 0], sizes = [8, 32], strides = [1, 1]} : vector<8x64xf32> to vector<8x32xf32>
    %512 = vector.extract_strided_slice %510 {offsets = [0, 32], sizes = [8, 32], strides = [1, 1]} : vector<8x64xf32> to vector<8x32xf32>
    %513 = vector.extract_strided_slice %498 {offsets = [0, 64], sizes = [8, 32], strides = [1, 1]} : vector<8x96xf32> to vector<8x32xf32>
    %514 = vector.extract_strided_slice %502 {offsets = [0, 64], sizes = [8, 32], strides = [1, 1]} : vector<8x96xf32> to vector<8x32xf32>
    %515 = arith.mulf %511, %514 : vector<8x32xf32>
    %516 = arith.addf %513, %515 : vector<8x32xf32>
    %517 = math.tanh %516 : vector<8x32xf32>
    %cst_156 = arith.constant 1.000000e+00 : f32
    %518 = vector.broadcast %cst_156 : f32 to vector<8x32xf32>
    %519 = arith.subf %518, %512 : vector<8x32xf32>
    %520 = arith.mulf %519, %517 : vector<8x32xf32>
    %521 = arith.mulf %512, %493 : vector<8x32xf32>
    %522 = arith.addf %520, %521 : vector<8x32xf32>
    %523 = vector.broadcast %66 : vector<1x32xf32> to vector<8x32xf32>
    %524 = arith.mulf %522, %523 : vector<8x32xf32>
    %cst_157 = arith.constant dense<0.000000e+00> : vector<8xf32>
    %525 = vector.multi_reduction <add>, %524, %cst_157 [1] : vector<8x32xf32> to vector<8xf32>
    %526 = vector.shape_cast %525 : vector<8xf32> to vector<8x1xf32>
    %527 = tpu.concatenate %323, %352, %381, %410, %439, %468, %497, %526 in 1 : vector<8x1xf32>, vector<8x1xf32>, vector<8x1xf32>, vector<8x1xf32>, vector<8x1xf32>, vector<8x1xf32>, vector<8x1xf32>, vector<8x1xf32> -> vector<8x8xf32>
    %c0_158 = arith.constant 0 : index
    %c0_159 = arith.constant 0 : index
    %528 = vector.load %arg12[%c0_158, %c0_159] : memref<1x1xf32, #tpu.memory_space<vmem>>, vector<1x1xf32>
    %529 = vector.broadcast %528 : vector<1x1xf32> to vector<8x8xf32>
    %530 = arith.addf %527, %529 : vector<8x8xf32>
    %531 = arith.negf %530 : vector<8x8xf32>
    %532 = math.exp %531 : vector<8x8xf32>
    %cst_160 = arith.constant 1.000000e+00 : f32
    %533 = vector.broadcast %cst_160 : f32 to vector<8x8xf32>
    %534 = arith.addf %533, %532 : vector<8x8xf32>
    %535 = arith.divf %533, %534 : vector<8x8xf32>
    %c0_161 = arith.constant 0 : index
    %c0_162 = arith.constant 0 : index
    %536 = vector.load %arg13[%c0_161, %c0_162] : memref<8x8xf32, #tpu.memory_space<vmem>>, vector<8x8xf32>
    tpu.vector_store %arg13[%c0_161, %c0_162], %535 {strides = array<i32>} : memref<8x8xf32, #tpu.memory_space<vmem>>, vector<8x8xf32>,
    return
  }
  func.func @transform_0(%arg0: i32, %arg1: memref<2x8xi32, #tpu.memory_space<smem>>) -> (i32, i32) {
    %c0_i32 = arith.constant 0 : i32
    %c0_i32_0 = arith.constant 0 : i32
    %c0_i32_1 = arith.constant 0 : i32
    return %c0_i32, %c0_i32_0 : i32, i32
  }
  func.func @transform_1(%arg0: i32, %arg1: memref<2x8xi32, #tpu.memory_space<smem>>) -> (i32, i32) {
    %c0_i32 = arith.constant 0 : i32
    %c0_i32_0 = arith.constant 0 : i32
    %c0_i32_1 = arith.constant 0 : i32
    return %c0_i32, %c0_i32_0 : i32, i32
  }
  func.func @transform_2(%arg0: i32, %arg1: memref<2x8xi32, #tpu.memory_space<smem>>) -> (i32, i32) {
    %c0_i32 = arith.constant 0 : i32
    %c0_i32_0 = arith.constant 0 : i32
    %c0_i32_1 = arith.constant 0 : i32
    return %c0_i32, %c0_i32_0 : i32, i32
  }
  func.func @transform_3(%arg0: i32, %arg1: memref<2x8xi32, #tpu.memory_space<smem>>) -> (i32, i32) {
    %c0_i32 = arith.constant 0 : i32
    %c0_i32_0 = arith.constant 0 : i32
    %c0_i32_1 = arith.constant 0 : i32
    return %c0_i32, %c0_i32_0 : i32, i32
  }
  func.func @transform_4(%arg0: i32, %arg1: memref<2x8xi32, #tpu.memory_space<smem>>) -> (i32, i32) {
    %c0_i32 = arith.constant 0 : i32
    %c0_i32_0 = arith.constant 0 : i32
    %c0_i32_1 = arith.constant 0 : i32
    return %c0_i32, %c0_i32_0 : i32, i32
  }
  func.func @transform_5(%arg0: i32, %arg1: memref<2x8xi32, #tpu.memory_space<smem>>) -> (i32, i32) {
    %c0_i32 = arith.constant 0 : i32
    %c0_i32_0 = arith.constant 0 : i32
    %c0_i32_1 = arith.constant 0 : i32
    return %c0_i32, %c0_i32_0 : i32, i32
  }
  func.func @transform_6(%arg0: i32, %arg1: memref<2x8xi32, #tpu.memory_space<smem>>) -> (i32, i32) {
    %c0_i32 = arith.constant 0 : i32
    %c0_i32_0 = arith.constant 0 : i32
    %c0_i32_1 = arith.constant 0 : i32
    return %c0_i32, %c0_i32_0 : i32, i32
  }
  func.func @transform_7(%arg0: i32, %arg1: memref<2x8xi32, #tpu.memory_space<smem>>) -> (i32, i32) {
    %c0_i32 = arith.constant 0 : i32
    %c0_i32_0 = arith.constant 0 : i32
    %c0_i32_1 = arith.constant 0 : i32
    return %c0_i32, %c0_i32_0 : i32, i32
  }
  func.func @transform_8(%arg0: i32, %arg1: memref<2x8xi32, #tpu.memory_space<smem>>) -> (i32, i32) {
    %c0_i32 = arith.constant 0 : i32
    %c0_i32_0 = arith.constant 0 : i32
    %c0_i32_1 = arith.constant 0 : i32
    return %c0_i32, %c0_i32_0 : i32, i32
  }
  func.func @transform_9(%arg0: i32, %arg1: memref<2x8xi32, #tpu.memory_space<smem>>) -> (i32, i32) {
    %c0_i32 = arith.constant 0 : i32
    %c0_i32_0 = arith.constant 0 : i32
    %c0_i32_1 = arith.constant 0 : i32
    return %c0_i32, %c0_i32_0 : i32, i32
  }
  func.func @transform_10(%arg0: i32, %arg1: memref<2x8xi32, #tpu.memory_space<smem>>) -> (i32, i32) {
    %c0_i32 = arith.constant 0 : i32
    %c0_i32_0 = arith.constant 0 : i32
    %c0_i32_1 = arith.constant 0 : i32
    return %c0_i32, %c0_i32_0 : i32, i32
  }
  func.func @transform_11(%arg0: i32, %arg1: memref<2x8xi32, #tpu.memory_space<smem>>) -> (i32, i32) {
    %c0_i32 = arith.constant 0 : i32
    %c0_i32_0 = arith.constant 0 : i32
    %c0_i32_1 = arith.constant 0 : i32
    return %c0_i32, %c0_i32_0 : i32, i32
  }
}

</mosaic_0001>

<llo_original>
// kernel: gru_decoder_forward.1
$region0: #{gru_decoder_forward.1}
  #allocation0 [shape = 'u32[]', space=smem, size = 0x4, offset = 0x4, fixed_abs, tag = 'smem constant byte address 0x4 - core index']
  #allocation1 [shape = 'u32[144,128]{1,0:T(1,128)}', space=vmem, size = 0x12000, scoped, tag = 'internal scratch']
  #allocation2 [shape = 'f32[64,32]{1,0:T(8,128)}', space=vmem, size = 0x8000, scoped, tag = 'scratch operand']
  #allocation3 [shape = 'f32[64,32]{1,0:T(8,128)}', space=vmem, size = 0x8000, scoped, tag = 'scratch operand']
  #allocation4 [shape = 's32[1]{0}', space=sflag, size = 0x4, scoped, tag = 'scoped memory for gru_decoder_forward.1']
  #allocation5 [shape = 'u8[1024]{0}', space=smem, size = 0x400, scoped, tag = 'prefetched SMEM operand 0']
  #allocation6 [shape = 'f32[1,1]{1,0:T(1,128)S(1)}', space=vmem, size = 0x200, scoped, tag = 'scoped memory for gru_decoder_forward.1']
  %s0 = inlined_call_operand.vmem [shape: s32[2,8], index: 0, kind: input, shape index: {}]
  %s1 = inlined_call_operand.vmem [shape: f32[16,32], index: 1, kind: input, shape index: {}]
  %s2 = inlined_call_operand.vmem [shape: bf16[32,96], index: 2, kind: input, shape index: {}]
  %s3 = inlined_call_operand.vmem [shape: bf16[32,96], index: 3, kind: input, shape index: {}]
  %s4 = inlined_call_operand.vmem [shape: f32[1,96], index: 4, kind: input, shape index: {}]
  %s5 = inlined_call_operand.vmem [shape: f32[1,96], index: 5, kind: input, shape index: {}]
  %s6 = inlined_call_operand.vmem [shape: bf16[32,96], index: 6, kind: input, shape index: {}]
  %s7 = inlined_call_operand.vmem [shape: bf16[32,96], index: 7, kind: input, shape index: {}]
  %s8 = inlined_call_operand.vmem [shape: f32[1,96], index: 8, kind: input, shape index: {}]
  %s9 = inlined_call_operand.vmem [shape: f32[1,96], index: 9, kind: input, shape index: {}]
  %s10 = inlined_call_operand.vmem [shape: f32[1,32], index: 10, kind: input, shape index: {}]
  %s11 = inlined_call_operand.<no memory space> [shape: f32[1,1], index: 11, kind: input, shape index: {}]
  %s12 = inlined_call_operand.vmem [shape: f32[8,8], index: 12, kind: output, shape index: {}]
  %s13 = sld [smem:[#allocation0]]
  $region54: #{gru_decoder_forward.1} parent=0
    _
  %s15 = ssub.s32 1, %s13
  %s16 = scalar_select 0, %s15, %s13
  %s17 = sshll.u32 %s0, 4
  %s18 = int_to_ptr.vmem [resolvable:$true] %s17
  %20 = dma.vmem_to_smem %s18, 32, [#allocation5], [#allocation4]
  %v21 = vstv %s11
  %22 = vst [vmem:[#allocation6] sm:$0x1] %v21
  %23 = dma.done [#allocation4], 32
  %24 = sfence
  // Predicated region
  $region2: #{gru_decoder_forward.1} parent=0 // pred_check
    _
  $region3: #{gru_decoder_forward.1} parent=0 // pred_check_branch
    %26 = sbr.rel (0) target = $region5
  $region4: #{gru_decoder_forward.1} parent=0 // pred_region
    _
  $region5: #{gru_decoder_forward.1} parent=0 // pred_fallthru
    _
  // Predicated region
  $region6: #{gru_decoder_forward.1} parent=0 // pred_check
    _
  $region7: #{gru_decoder_forward.1} parent=0 // pred_check_branch
    %28 = sbr.rel (0) target = $region9
  $region8: #{gru_decoder_forward.1} parent=0 // pred_region
    _
  $region9: #{gru_decoder_forward.1} parent=0 // pred_fallthru
    _
  // Predicated region
  $region10: #{gru_decoder_forward.1} parent=0 // pred_check
    _
  $region11: #{gru_decoder_forward.1} parent=0 // pred_check_branch
    %30 = sbr.rel (0) target = $region13
  $region12: #{gru_decoder_forward.1} parent=0 // pred_region
    _
  $region13: #{gru_decoder_forward.1} parent=0 // pred_fallthru
    _
  // Predicated region
  $region14: #{gru_decoder_forward.1} parent=0 // pred_check
    _
  $region15: #{gru_decoder_forward.1} parent=0 // pred_check_branch
    %32 = sbr.rel (0) target = $region17
  $region16: #{gru_decoder_forward.1} parent=0 // pred_region
    _
  $region17: #{gru_decoder_forward.1} parent=0 // pred_fallthru
    _
  // Predicated region
  $region18: #{gru_decoder_forward.1} parent=0 // pred_check
    _
  $region19: #{gru_decoder_forward.1} parent=0 // pred_check_branch
    %34 = sbr.rel (0) target = $region21
  $region20: #{gru_decoder_forward.1} parent=0 // pred_region
    _
  $region21: #{gru_decoder_forward.1} parent=0 // pred_fallthru
    _
  // Predicated region
  $region22: #{gru_decoder_forward.1} parent=0 // pred_check
    _
  $region23: #{gru_decoder_forward.1} parent=0 // pred_check_branch
    %36 = sbr.rel (0) target = $region25
  $region24: #{gru_decoder_forward.1} parent=0 // pred_region
    _
  $region25: #{gru_decoder_forward.1} parent=0 // pred_fallthru
    _
  // Predicated region
  $region26: #{gru_decoder_forward.1} parent=0 // pred_check
    _
  $region27: #{gru_decoder_forward.1} parent=0 // pred_check_branch
    %38 = sbr.rel (0) target = $region29
  $region28: #{gru_decoder_forward.1} parent=0 // pred_region
    _
  $region29: #{gru_decoder_forward.1} parent=0 // pred_fallthru
    _
  // Predicated region
  $region30: #{gru_decoder_forward.1} parent=0 // pred_check
    _
  $region31: #{gru_decoder_forward.1} parent=0 // pred_check_branch
    %40 = sbr.rel (0) target = $region33
  $region32: #{gru_decoder_forward.1} parent=0 // pred_region
    _
  $region33: #{gru_decoder_forward.1} parent=0 // pred_fallthru
    _
  // Predicated region
  $region34: #{gru_decoder_forward.1} parent=0 // pred_check
    _
  $region35: #{gru_decoder_forward.1} parent=0 // pred_check_branch
    %42 = sbr.rel (0) target = $region37
  $region36: #{gru_decoder_forward.1} parent=0 // pred_region
    _
  $region37: #{gru_decoder_forward.1} parent=0 // pred_fallthru
    _
  // Predicated region
  $region38: #{gru_decoder_forward.1} parent=0 // pred_check
    _
  $region39: #{gru_decoder_forward.1} parent=0 // pred_check_branch
    %44 = sbr.rel (0) target = $region41
  $region40: #{gru_decoder_forward.1} parent=0 // pred_region
    _
  $region41: #{gru_decoder_forward.1} parent=0 // pred_fallthru
    _
  // Predicated region
  $region42: #{gru_decoder_forward.1} parent=0 // pred_check
    _
  $region43: #{gru_decoder_forward.1} parent=0 // pred_check_branch
    %46 = sbr.rel (0) target = $region45
  $region44: #{gru_decoder_forward.1} parent=0 // pred_region
    _
  $region45: #{gru_decoder_forward.1} parent=0 // pred_fallthru
    _
  %vm48 = vcmask 261120
  %49 = vst.msk [vmem:[#allocation2] sm:$0xff] %vm48, 0.0
  %50 = vst.msk [vmem:[#allocation2 + $0x8] sm:$0xff] %vm48, 0.0
  %51 = vst.msk [vmem:[#allocation2 + $0x10] sm:$0xff] %vm48, 0.0
  %52 = vst.msk [vmem:[#allocation2 + $0x18] sm:$0xff] %vm48, 0.0
  %53 = vst.msk [vmem:[#allocation2 + $0x20] sm:$0xff] %vm48, 0.0
  %54 = vst.msk [vmem:[#allocation2 + $0x28] sm:$0xff] %vm48, 0.0
  %55 = vst.msk [vmem:[#allocation2 + $0x30] sm:$0xff] %vm48, 0.0
  %56 = vst.msk [vmem:[#allocation2 + $0x38] sm:$0xff] %vm48, 0.0
  %s57 = sld [smem:[#allocation5]]
  %s58 = scalar_lea.vmem %s1, %s57
  %v59 = vld [vmem:[%s58] sm:$0x1]
  %vm60 = vcmask 253952
  %61 = vst.msk [vmem:[#allocation2] sm:$0x1] %vm60, %v59
  %s62 = sld [smem:[#allocation5 + $0x80]]
  %s63 = scalar_lea.vmem %s1, %s62
  %v64 = vld [vmem:[%s63] sm:$0x1]
  %65 = vst.msk [vmem:[#allocation2 + $0x1] sm:$0x1] %vm60, %v64
  %s66 = sld [smem:[#allocation5 + $0x1]]
  %s67 = scalar_lea.vmem %s1, %s66
  %v68 = vld [vmem:[%s67] sm:$0x1]
  %69 = vst.msk [vmem:[#allocation2 + $0x8] sm:$0x1] %vm60, %v68
  %s70 = sld [smem:[#allocation5 + $0x81]]
  %s71 = scalar_lea.vmem %s1, %s70
  %v72 = vld [vmem:[%s71] sm:$0x1]
  %73 = vst.msk [vmem:[#allocation2 + $0x9] sm:$0x1] %vm60, %v72
  %s74 = sld [smem:[#allocation5 + $0x2]]
  %s75 = scalar_lea.vmem %s1, %s74
  %v76 = vld [vmem:[%s75] sm:$0x1]
  %77 = vst.msk [vmem:[#allocation2 + $0x10] sm:$0x1] %vm60, %v76
  %s78 = sld [smem:[#allocation5 + $0x82]]
  %s79 = scalar_lea.vmem %s1, %s78
  %v80 = vld [vmem:[%s79] sm:$0x1]
  %81 = vst.msk [vmem:[#allocation2 + $0x11] sm:$0x1] %vm60, %v80
  %s82 = sld [smem:[#allocation5 + $0x3]]
  %s83 = scalar_lea.vmem %s1, %s82
  %v84 = vld [vmem:[%s83] sm:$0x1]
  %85 = vst.msk [vmem:[#allocation2 + $0x18] sm:$0x1] %vm60, %v84
  %s86 = sld [smem:[#allocation5 + $0x83]]
  %s87 = scalar_lea.vmem %s1, %s86
  %v88 = vld [vmem:[%s87] sm:$0x1]
  %89 = vst.msk [vmem:[#allocation2 + $0x19] sm:$0x1] %vm60, %v88
  %s90 = sld [smem:[#allocation5 + $0x4]]
  %s91 = scalar_lea.vmem %s1, %s90
  %v92 = vld [vmem:[%s91] sm:$0x1]
  %93 = vst.msk [vmem:[#allocation2 + $0x20] sm:$0x1] %vm60, %v92
  %s94 = sld [smem:[#allocation5 + $0x84]]
  %s95 = scalar_lea.vmem %s1, %s94
  %v96 = vld [vmem:[%s95] sm:$0x1]
  %97 = vst.msk [vmem:[#allocation2 + $0x21] sm:$0x1] %vm60, %v96
  %s98 = sld [smem:[#allocation5 + $0x5]]
  %s99 = scalar_lea.vmem %s1, %s98
  %v100 = vld [vmem:[%s99] sm:$0x1]
  %101 = vst.msk [vmem:[#allocation2 + $0x28] sm:$0x1] %vm60, %v100
  %s102 = sld [smem:[#allocation5 + $0x85]]
  %s103 = scalar_lea.vmem %s1, %s102
  %v104 = vld [vmem:[%s103] sm:$0x1]
  %105 = vst.msk [vmem:[#allocation2 + $0x29] sm:$0x1] %vm60, %v104
  %s106 = sld [smem:[#allocation5 + $0x6]]
  %s107 = scalar_lea.vmem %s1, %s106
  %v108 = vld [vmem:[%s107] sm:$0x1]
  %109 = vst.msk [vmem:[#allocation2 + $0x30] sm:$0x1] %vm60, %v108
  %s110 = sld [smem:[#allocation5 + $0x86]]
  %s111 = scalar_lea.vmem %s1, %s110
  %v112 = vld [vmem:[%s111] sm:$0x1]
  %113 = vst.msk [vmem:[#allocation2 + $0x31] sm:$0x1] %vm60, %v112
  %s114 = sld [smem:[#allocation5 + $0x7]]
  %s115 = scalar_lea.vmem %s1, %s114
  %v116 = vld [vmem:[%s115] sm:$0x1]
  %117 = vst.msk [vmem:[#allocation2 + $0x38] sm:$0x1] %vm60, %v116
  %s118 = sld [smem:[#allocation5 + $0x87]]
  %s119 = scalar_lea.vmem %s1, %s118
  %v120 = vld [vmem:[%s119] sm:$0x1]
  %121 = vst.msk [vmem:[#allocation2 + $0x39] sm:$0x1] %vm60, %v120
  %v122 = vld [vmem:[%s10] sm:$0x1]
  %v123 = vld [vmem:[%s2] sm:$0xf]
  %v124 = vld [vmem:[%s2 + $0x4] sm:$0xf]
  %v125 = vld [vmem:[%s2 + $0x8] sm:$0xf]
  %v126 = vld [vmem:[%s2 + $0xc] sm:$0xf]
  %v127 = vld [vmem:[%s3] sm:$0xf]
  %v128 = vld [vmem:[%s3 + $0x4] sm:$0xf]
  %v129 = vld [vmem:[%s3 + $0x8] sm:$0xf]
  %v130 = vld [vmem:[%s3 + $0xc] sm:$0xf]
  %v131 = vld [vmem:[%s4] sm:$0x1]
  %v132 = vld [vmem:[%s5] sm:$0x1]
  %v133 = vld [vmem:[#allocation2] sm:$0xff]
  %v134 = vld [vmem:[#allocation2 + $0x8] sm:$0xff]
  %v135 = vld [vmem:[#allocation2 + $0x10] sm:$0xff]
  %v136 = vld [vmem:[#allocation2 + $0x18] sm:$0xff]
  %v137 = vld [vmem:[#allocation2 + $0x20] sm:$0xff]
  %v138 = vld [vmem:[#allocation2 + $0x28] sm:$0xff]
  %v139 = vld [vmem:[#allocation2 + $0x30] sm:$0xff]
  %v140 = vld [vmem:[#allocation2 + $0x38] sm:$0xff]
  %v141 = vpack.c.bf16 %v134, %v133
  %v142 = vpack.c.bf16 %v136, %v135
  %v143 = vpack.c.bf16 %v138, %v137
  %v144 = vpack.c.bf16 %v140, %v139
  %v146 = vlaneseq
  %v147 = vshrl.u32 %v146, 7
  %v148 = vsub.s32 0, %v147
  %v149 = vrot.slane %v131, %v148
  %v155 = vunpack.c.l.b16 %v123
  %v156 = vunpack.c.l.b16 %v124
  %v157 = vunpack.c.l.b16 %v125
  %v158 = vunpack.c.l.b16 %v126
  %v159 = vpack.c.b16 %v156, %v155
  %v160 = vpack.c.b16 %v158, %v157
  %v164 = vsel %vm48, %v141, 0
  %v167 = vsel %vm48, %v142, 0
  %v170 = vsel %vm48, %v143, 0
  %v173 = vsel %vm48, %v144, 0
  %175 = vmatprep.subr.bf16.mxu0 0
  %176 = vmatpush1.bf16.msra.mxu0 %v159
  %177 = vmatprep.subr.bf16.mxu0 0
  %178 = vmatpush1.bf16.msra.mxu0 %v160
  %179 = vmatprep.subr.bf16.mxu0 0
  %180 = vmatpush1.bf16.msra.mxu0 0
  %181 = vmatprep.subr.bf16.mxu0 0
  %182 = vmatpush1.bf16.msra.mxu0 0
  %183 = vmatprep.subr.bf16.mxu0 0
  %184 = vmatpush1.bf16.msra.mxu0 0
  %185 = vmatprep.subr.bf16.mxu0 0
  %186 = vmatpush1.bf16.msra.mxu0 0
  %187 = vmatprep.subr.bf16.mxu0 0
  %188 = vmatpush1.bf16.msra.mxu0 0
  %189 = vmatprep.subr.bf16.mxu0 0
  %190 = vmatpush1.bf16.msra.mxu0 0
  %191 = vmatprep.subr.bf16.mxu0 0
  %192 = vmatpush1.bf16.msra.mxu0 0
  %193 = vmatprep.subr.bf16.mxu0 0
  %194 = vmatpush1.bf16.msra.mxu0 0
  %195 = vmatprep.subr.bf16.mxu0 0
  %196 = vmatpush1.bf16.msra.mxu0 0
  %197 = vmatprep.subr.bf16.mxu0 0
  %198 = vmatpush1.bf16.msra.mxu0 0
  %199 = vmatprep.subr.bf16.mxu0 0
  %200 = vmatpush1.bf16.msra.mxu0 0
  %201 = vmatprep.subr.bf16.mxu0 0
  %202 = vmatpush1.bf16.msra.mxu0 0
  %203 = vmatprep.subr.bf16.mxu0 0
  %204 = vmatpush1.bf16.msra.mxu0 0
  %205 = vmatprep.subr.bf16.mxu0 0
  %206 = vmatpush1.bf16.msra.mxu0 0
  %207 = vmatprep.mubr.bf16.mxu0 0
  %208 = vmatmul.mubr.bf16.gmra.mrb[0].mxu0 %v164
  %v209 = vpop.f32.mrb[0].mxu0
  %v210 = vadd.f32 %v149, %v209
  %v211 = vpop.f32.mrb[0].mxu0
  %v212 = vpop.f32.mrb[0].mxu0
  %v213 = vadd.f32 %v149, %v212
  %v214 = vpop.f32.mrb[0].mxu0
  %215 = vmatprep.mubr.bf16.mxu0 0
  %216 = vmatmul.mubr.bf16.gmra.mrb[0].mxu0 %v167
  %v217 = vpop.f32.mrb[0].mxu0
  %v218 = vadd.f32 %v149, %v217
  %v219 = vpop.f32.mrb[0].mxu0
  %v220 = vpop.f32.mrb[0].mxu0
  %v221 = vadd.f32 %v149, %v220
  %v222 = vpop.f32.mrb[0].mxu0
  %223 = vmatprep.mubr.bf16.mxu0 0
  %224 = vmatmul.mubr.bf16.gmra.mrb[0].mxu0 %v170
  %v225 = vpop.f32.mrb[0].mxu0
  %v226 = vadd.f32 %v149, %v225
  %v227 = vpop.f32.mrb[0].mxu0
  %v228 = vpop.f32.mrb[0].mxu0
  %v229 = vadd.f32 %v149, %v228
  %v230 = vpop.f32.mrb[0].mxu0
  %231 = vmatprep.mubr.bf16.mxu0 0
  %232 = vmatmul.mubr.bf16.gmra.mrb[0].mxu0 %v173
  %v233 = vpop.f32.mrb[0].mxu0
  %v234 = vadd.f32 %v149, %v233
  %v235 = vpop.f32.mrb[0].mxu0
  %v236 = vpop.f32.mrb[0].mxu0
  %v237 = vadd.f32 %v149, %v236
  %v238 = vpop.f32.mrb[0].mxu0
  %239 = vdwg.mxu0
  %v241 = vlaneseq
  %v242 = vshrl.u32 %v241, 7
  %v243 = vsub.s32 0, %v242
  %v244 = vrot.slane %v132, %v243
  %v250 = vunpack.c.l.b16 %v127
  %v251 = vunpack.c.l.b16 %v128
  %v252 = vunpack.c.l.b16 %v129
  %v253 = vunpack.c.l.b16 %v130
  %v254 = vpack.c.b16 %v251, %v250
  %v255 = vpack.c.b16 %v253, %v252
  %v259 = vsel %vm48, 0, 0
  %261 = vmatprep.subr.bf16.mxu0 0
  %262 = vmatpush1.bf16.msra.mxu0 %v254
  %263 = vmatprep.subr.bf16.mxu0 0
  %264 = vmatpush1.bf16.msra.mxu0 %v255
  %265 = vmatprep.subr.bf16.mxu0 0
  %266 = vmatpush1.bf16.msra.mxu0 0
  %267 = vmatprep.subr.bf16.mxu0 0
  %268 = vmatpush1.bf16.msra.mxu0 0
  %269 = vmatprep.subr.bf16.mxu0 0
  %270 = vmatpush1.bf16.msra.mxu0 0
  %271 = vmatprep.subr.bf16.mxu0 0
  %272 = vmatpush1.bf16.msra.mxu0 0
  %273 = vmatprep.subr.bf16.mxu0 0
  %274 = vmatpush1.bf16.msra.mxu0 0
  %275 = vmatprep.subr.bf16.mxu0 0
  %276 = vmatpush1.bf16.msra.mxu0 0
  %277 = vmatprep.subr.bf16.mxu0 0
  %278 = vmatpush1.bf16.msra.mxu0 0
  %279 = vmatprep.subr.bf16.mxu0 0
  %280 = vmatpush1.bf16.msra.mxu0 0
  %281 = vmatprep.subr.bf16.mxu0 0
  %282 = vmatpush1.bf16.msra.mxu0 0
  %283 = vmatprep.subr.bf16.mxu0 0
  %284 = vmatpush1.bf16.msra.mxu0 0
  %285 = vmatprep.subr.bf16.mxu0 0
  %286 = vmatpush1.bf16.msra.mxu0 0
  %287 = vmatprep.subr.bf16.mxu0 0
  %288 = vmatpush1.bf16.msra.mxu0 0
  %289 = vmatprep.subr.bf16.mxu0 0
  %290 = vmatpush1.bf16.msra.mxu0 0
  %291 = vmatprep.subr.bf16.mxu0 0
  %292 = vmatpush1.bf16.msra.mxu0 0
  %293 = vmatprep.mubr.bf16.mxu0 0
  %294 = vmatmul.mubr.bf16.gmra.mrb[0].mxu0 %v259
  %v295 = vpop.f32.mrb[0].mxu0
  %v296 = vadd.f32 %v244, %v295
  %v297 = vpop.f32.mrb[0].mxu0
  %v298 = vpop.f32.mrb[0].mxu0
  %v299 = vpop.f32.mrb[0].mxu0
  %300 = vdwg.mxu0
  %v301 = vadd.f32 %v210, %v296
  %v302 = vxor.u32 %v301, 2147483648
  %v303 = vmul.f32 %v302, 1.442695
  %v304 = vpow.pop %v303
  %v305 = vadd.f32 %v304, 1.0
  %v306 = vrcp.pop %v305
  %v307 = vmul.f32 1.0, %v306
  %309 = vrot.lane.b32.xlu0 %v296, 64
  %v310 = vpop.permute.xlu0 %309
  %v312 = vmul.f32 %v307, %v310
  %314 = vrot.lane.b32.xlu0 %v312, 64
  %v315 = vpop.permute.xlu0 %314
  %v317 = vadd.f32 %v210, %v315
  %v318 = vtanh.pop %v317
  %v319 = vsub.f32 1.0, %v307
  %321 = vrot.lane.b32.xlu0 %v318, 96
  %v322 = vpop.permute.xlu0 %321
  %v324 = vmul.f32 %v319, %v322
  %v325 = vmul.f32 %v307, 0.0
  %v326 = vadd.f32 %v324, %v325
  %328 = vrot.lane.b32.xlu0 %v326, 96
  %v329 = vpop.permute.xlu0 %328
  %331 = vst.msk [vmem:[#allocation3] sm:$0xff] %vm48, %v329
  %v332 = vpack.c.bf16 %v326, %v326
  %334 = vrot.lane.b32.xlu0 %v332, 96
  %v335 = vpop.permute.xlu0 %334
  %v337 = vsel %vm48, %v335, 0
  %339 = vmatprep.subr.bf16.mxu0 0
  %340 = vmatpush1.bf16.msra.mxu0 %v254
  %341 = vmatprep.subr.bf16.mxu0 0
  %342 = vmatpush1.bf16.msra.mxu0 %v255
  %343 = vmatprep.subr.bf16.mxu0 0
  %344 = vmatpush1.bf16.msra.mxu0 0
  %345 = vmatprep.subr.bf16.mxu0 0
  %346 = vmatpush1.bf16.msra.mxu0 0
  %347 = vmatprep.subr.bf16.mxu0 0
  %348 = vmatpush1.bf16.msra.mxu0 0
  %349 = vmatprep.subr.bf16.mxu0 0
  %350 = vmatpush1.bf16.msra.mxu0 0
  %351 = vmatprep.subr.bf16.mxu0 0
  %352 = vmatpush1.bf16.msra.mxu0 0
  %353 = vmatprep.subr.bf16.mxu0 0
  %354 = vmatpush1.bf16.msra.mxu0 0
  %355 = vmatprep.subr.bf16.mxu0 0
  %356 = vmatpush1.bf16.msra.mxu0 0
  %357 = vmatprep.subr.bf16.mxu0 0
  %358 = vmatpush1.bf16.msra.mxu0 0
  %359 = vmatprep.subr.bf16.mxu0 0
  %360 = vmatpush1.bf16.msra.mxu0 0
  %361 = vmatprep.subr.bf16.mxu0 0
  %362 = vmatpush1.bf16.msra.mxu0 0
  %363 = vmatprep.subr.bf16.mxu0 0
  %364 = vmatpush1.bf16.msra.mxu0 0
  %365 = vmatprep.subr.bf16.mxu0 0
  %366 = vmatpush1.bf16.msra.mxu0 0
  %367 = vmatprep.subr.bf16.mxu0 0
  %368 = vmatpush1.bf16.msra.mxu0 0
  %369 = vmatprep.subr.bf16.mxu0 0
  %370 = vmatpush1.bf16.msra.mxu0 0
  %371 = vmatprep.mubr.bf16.mxu0 0
  %372 = vmatmul.mubr.bf16.gmra.mrb[0].mxu0 %v337
  %v373 = vpop.f32.mrb[0].mxu0
  %v374 = vadd.f32 %v244, %v373
  %v375 = vpop.f32.mrb[0].mxu0
  %v376 = vpop.f32.mrb[0].mxu0
  %v377 = vpop.f32.mrb[0].mxu0
  %378 = vdwg.mxu0
  %v379 = vadd.f32 %v213, %v374
  %v380 = vxor.u32 %v379, 2147483648
  %v381 = vmul.f32 %v380, 1.442695
  %v382 = vpow.pop %v381
  %v383 = vadd.f32 %v382, 1.0
  %v384 = vrcp.pop %v383
  %v385 = vmul.f32 1.0, %v384
  %387 = vrot.lane.b32.xlu0 %v374, 64
  %v388 = vpop.permute.xlu0 %387
  %v390 = vmul.f32 %v385, %v388
  %392 = vrot.lane.b32.xlu0 %v390, 64
  %v393 = vpop.permute.xlu0 %392
  %v395 = vadd.f32 %v213, %v393
  %v396 = vtanh.pop %v395
  %v397 = vsub.f32 1.0, %v385
  %399 = vrot.lane.b32.xlu0 %v396, 96
  %v400 = vpop.permute.xlu0 %399
  %v402 = vmul.f32 %v397, %v400
  %v403 = vmul.f32 %v385, %v326
  %v404 = vadd.f32 %v402, %v403
  %406 = vrot.lane.b32.xlu0 %v404, 96
  %v407 = vpop.permute.xlu0 %406
  %409 = vst.msk [vmem:[#allocation3 + $0x8] sm:$0xff] %vm48, %v407
  %v410 = vpack.c.bf16 %v404, %v404
  %412 = vrot.lane.b32.xlu0 %v410, 96
  %v413 = vpop.permute.xlu0 %412
  %v415 = vsel %vm48, %v413, 0
  %417 = vmatprep.subr.bf16.mxu0 0
  %418 = vmatpush1.bf16.msra.mxu0 %v254
  %419 = vmatprep.subr.bf16.mxu0 0
  %420 = vmatpush1.bf16.msra.mxu0 %v255
  %421 = vmatprep.subr.bf16.mxu0 0
  %422 = vmatpush1.bf16.msra.mxu0 0
  %423 = vmatprep.subr.bf16.mxu0 0
  %424 = vmatpush1.bf16.msra.mxu0 0
  %425 = vmatprep.subr.bf16.mxu0 0
  %426 = vmatpush1.bf16.msra.mxu0 0
  %427 = vmatprep.subr.bf16.mxu0 0
  %428 = vmatpush1.bf16.msra.mxu0 0
  %429 = vmatprep.subr.bf16.mxu0 0
  %430 = vmatpush1.bf16.msra.mxu0 0
  %431 = vmatprep.subr.bf16.mxu0 0
  %432 = vmatpush1.bf16.msra.mxu0 0
  %433 = vmatprep.subr.bf16.mxu0 0
  %434 = vmatpush1.bf16.msra.mxu0 0
  %435 = vmatprep.subr.bf16.mxu0 0
  %436 = vmatpush1.bf16.msra.mxu0 0
  %437 = vmatprep.subr.bf16.mxu0 0
  %438 = vmatpush1.bf16.msra.mxu0 0
  %439 = vmatprep.subr.bf16.mxu0 0
  %440 = vmatpush1.bf16.msra.mxu0 0
  %441 = vmatprep.subr.bf16.mxu0 0
  %442 = vmatpush1.bf16.msra.mxu0 0
  %443 = vmatprep.subr.bf16.mxu0 0
  %444 = vmatpush1.bf16.msra.mxu0 0
  %445 = vmatprep.subr.bf16.mxu0 0
  %446 = vmatpush1.bf16.msra.mxu0 0
  %447 = vmatprep.subr.bf16.mxu0 0
  %448 = vmatpush1.bf16.msra.mxu0 0
  %449 = vmatprep.mubr.bf16.mxu0 0
  %450 = vmatmul.mubr.bf16.gmra.mrb[0].mxu0 %v415
  %v451 = vpop.f32.mrb[0].mxu0
  %v452 = vadd.f32 %v244, %v451
  %v453 = vpop.f32.mrb[0].mxu0
  %v454 = vpop.f32.mrb[0].mxu0
  %v455 = vpop.f32.mrb[0].mxu0
  %456 = vdwg.mxu0
  %v457 = vadd.f32 %v218, %v452
  %v458 = vxor.u32 %v457, 2147483648
  %v459 = vmul.f32 %v458, 1.442695
  %v460 = vpow.pop %v459
  %v461 = vadd.f32 %v460, 1.0
  %v462 = vrcp.pop %v461
  %v463 = vmul.f32 1.0, %v462
  %465 = vrot.lane.b32.xlu0 %v452, 64
  %v466 = vpop.permute.xlu0 %465
  %v468 = vmul.f32 %v463, %v466
  %470 = vrot.lane.b32.xlu0 %v468, 64
  %v471 = vpop.permute.xlu0 %470
  %v473 = vadd.f32 %v218, %v471
  %v474 = vtanh.pop %v473
  %v475 = vsub.f32 1.0, %v463
  %477 = vrot.lane.b32.xlu0 %v474, 96
  %v478 = vpop.permute.xlu0 %477
  %v480 = vmul.f32 %v475, %v478
  %v481 = vmul.f32 %v463, %v404
  %v482 = vadd.f32 %v480, %v481
  %484 = vrot.lane.b32.xlu0 %v482, 96
  %v485 = vpop.permute.xlu0 %484
  %487 = vst.msk [vmem:[#allocation3 + $0x10] sm:$0xff] %vm48, %v485
  %v488 = vpack.c.bf16 %v482, %v482
  %490 = vrot.lane.b32.xlu0 %v488, 96
  %v491 = vpop.permute.xlu0 %490
  %v493 = vsel %vm48, %v491, 0
  %495 = vmatprep.subr.bf16.mxu0 0
  %496 = vmatpush1.bf16.msra.mxu0 %v254
  %497 = vmatprep.subr.bf16.mxu0 0
  %498 = vmatpush1.bf16.msra.mxu0 %v255
  %499 = vmatprep.subr.bf16.mxu0 0
  %500 = vmatpush1.bf16.msra.mxu0 0
  %501 = vmatprep.subr.bf16.mxu0 0
  %502 = vmatpush1.bf16.msra.mxu0 0
  %503 = vmatprep.subr.bf16.mxu0 0
  %504 = vmatpush1.bf16.msra.mxu0 0
  %505 = vmatprep.subr.bf16.mxu0 0
  %506 = vmatpush1.bf16.msra.mxu0 0
  %507 = vmatprep.subr.bf16.mxu0 0
  %508 = vmatpush1.bf16.msra.mxu0 0
  %509 = vmatprep.subr.bf16.mxu0 0
  %510 = vmatpush1.bf16.msra.mxu0 0
  %511 = vmatprep.subr.bf16.mxu0 0
  %512 = vmatpush1.bf16.msra.mxu0 0
  %513 = vmatprep.subr.bf16.mxu0 0
  %514 = vmatpush1.bf16.msra.mxu0 0
  %515 = vmatprep.subr.bf16.mxu0 0
  %516 = vmatpush1.bf16.msra.mxu0 0
  %517 = vmatprep.subr.bf16.mxu0 0
  %518 = vmatpush1.bf16.msra.mxu0 0
  %519 = vmatprep.subr.bf16.mxu0 0
  %520 = vmatpush1.bf16.msra.mxu0 0
  %521 = vmatprep.subr.bf16.mxu0 0
  %522 = vmatpush1.bf16.msra.mxu0 0
  %523 = vmatprep.subr.bf16.mxu0 0
  %524 = vmatpush1.bf16.msra.mxu0 0
  %525 = vmatprep.subr.bf16.mxu0 0
  %526 = vmatpush1.bf16.msra.mxu0 0
  %527 = vmatprep.mubr.bf16.mxu0 0
  %528 = vmatmul.mubr.bf16.gmra.mrb[0].mxu0 %v493
  %v529 = vpop.f32.mrb[0].mxu0
  %v530 = vadd.f32 %v244, %v529
  %v531 = vpop.f32.mrb[0].mxu0
  %v532 = vpop.f32.mrb[0].mxu0
  %v533 = vpop.f32.mrb[0].mxu0
  %534 = vdwg.mxu0
  %v535 = vadd.f32 %v221, %v530
  %v536 = vxor.u32 %v535, 2147483648
  %v537 = vmul.f32 %v536, 1.442695
  %v538 = vpow.pop %v537
  %v539 = vadd.f32 %v538, 1.0
  %v540 = vrcp.pop %v539
  %v541 = vmul.f32 1.0, %v540
  %543 = vrot.lane.b32.xlu0 %v530, 64
  %v544 = vpop.permute.xlu0 %543
  %v546 = vmul.f32 %v541, %v544
  %548 = vrot.lane.b32.xlu0 %v546, 64
  %v549 = vpop.permute.xlu0 %548
  %v551 = vadd.f32 %v221, %v549
  %v552 = vtanh.pop %v551
  %v553 = vsub.f32 1.0, %v541
  %555 = vrot.lane.b32.xlu0 %v552, 96
  %v556 = vpop.permute.xlu0 %555
  %v558 = vmul.f32 %v553, %v556
  %v559 = vmul.f32 %v541, %v482
  %v560 = vadd.f32 %v558, %v559
  %562 = vrot.lane.b32.xlu0 %v560, 96
  %v563 = vpop.permute.xlu0 %562
  %565 = vst.msk [vmem:[#allocation3 + $0x18] sm:$0xff] %vm48, %v563
  %v566 = vpack.c.bf16 %v560, %v560
  %568 = vrot.lane.b32.xlu0 %v566, 96
  %v569 = vpop.permute.xlu0 %568
  %v571 = vsel %vm48, %v569, 0
  %573 = vmatprep.subr.bf16.mxu0 0
  %574 = vmatpush1.bf16.msra.mxu0 %v254
  %575 = vmatprep.subr.bf16.mxu0 0
  %576 = vmatpush1.bf16.msra.mxu0 %v255
  %577 = vmatprep.subr.bf16.mxu0 0
  %578 = vmatpush1.bf16.msra.mxu0 0
  %579 = vmatprep.subr.bf16.mxu0 0
  %580 = vmatpush1.bf16.msra.mxu0 0
  %581 = vmatprep.subr.bf16.mxu0 0
  %582 = vmatpush1.bf16.msra.mxu0 0
  %583 = vmatprep.subr.bf16.mxu0 0
  %584 = vmatpush1.bf16.msra.mxu0 0
  %585 = vmatprep.subr.bf16.mxu0 0
  %586 = vmatpush1.bf16.msra.mxu0 0
  %587 = vmatprep.subr.bf16.mxu0 0
  %588 = vmatpush1.bf16.msra.mxu0 0
  %589 = vmatprep.subr.bf16.mxu0 0
  %590 = vmatpush1.bf16.msra.mxu0 0
  %591 = vmatprep.subr.bf16.mxu0 0
  %592 = vmatpush1.bf16.msra.mxu0 0
  %593 = vmatprep.subr.bf16.mxu0 0
  %594 = vmatpush1.bf16.msra.mxu0 0
  %595 = vmatprep.subr.bf16.mxu0 0
  %596 = vmatpush1.bf16.msra.mxu0 0
  %597 = vmatprep.subr.bf16.mxu0 0
  %598 = vmatpush1.bf16.msra.mxu0 0
  %599 = vmatprep.subr.bf16.mxu0 0
  %600 = vmatpush1.bf16.msra.mxu0 0
  %601 = vmatprep.subr.bf16.mxu0 0
  %602 = vmatpush1.bf16.msra.mxu0 0
  %603 = vmatprep.subr.bf16.mxu0 0
  %604 = vmatpush1.bf16.msra.mxu0 0
  %605 = vmatprep.mubr.bf16.mxu0 0
  %606 = vmatmul.mubr.bf16.gmra.mrb[0].mxu0 %v571
  %v607 = vpop.f32.mrb[0].mxu0
  %v608 = vadd.f32 %v244, %v607
  %v609 = vpop.f32.mrb[0].mxu0
  %v610 = vpop.f32.mrb[0].mxu0
  %v611 = vpop.f32.mrb[0].mxu0
  %612 = vdwg.mxu0
  %v613 = vadd.f32 %v226, %v608
  %v614 = vxor.u32 %v613, 2147483648
  %v615 = vmul.f32 %v614, 1.442695
  %v616 = vpow.pop %v615
  %v617 = vadd.f32 %v616, 1.0
  %v618 = vrcp.pop %v617
  %v619 = vmul.f32 1.0, %v618
  %621 = vrot.lane.b32.xlu0 %v608, 64
  %v622 = vpop.permute.xlu0 %621
  %v624 = vmul.f32 %v619, %v622
  %626 = vrot.lane.b32.xlu0 %v624, 64
  %v627 = vpop.permute.xlu0 %626
  %v629 = vadd.f32 %v226, %v627
  %v630 = vtanh.pop %v629
  %v631 = vsub.f32 1.0, %v619
  %633 = vrot.lane.b32.xlu0 %v630, 96
  %v634 = vpop.permute.xlu0 %633
  %v636 = vmul.f32 %v631, %v634
  %v637 = vmul.f32 %v619, %v560
  %v638 = vadd.f32 %v636, %v637
  %640 = vrot.lane.b32.xlu0 %v638, 96
  %v641 = vpop.permute.xlu0 %640
  %643 = vst.msk [vmem:[#allocation3 + $0x20] sm:$0xff] %vm48, %v641
  %v644 = vpack.c.bf16 %v638, %v638
  %646 = vrot.lane.b32.xlu0 %v644, 96
  %v647 = vpop.permute.xlu0 %646
  %v649 = vsel %vm48, %v647, 0
  %651 = vmatprep.subr.bf16.mxu0 0
  %652 = vmatpush1.bf16.msra.mxu0 %v254
  %653 = vmatprep.subr.bf16.mxu0 0
  %654 = vmatpush1.bf16.msra.mxu0 %v255
  %655 = vmatprep.subr.bf16.mxu0 0
  %656 = vmatpush1.bf16.msra.mxu0 0
  %657 = vmatprep.subr.bf16.mxu0 0
  %658 = vmatpush1.bf16.msra.mxu0 0
  %659 = vmatprep.subr.bf16.mxu0 0
  %660 = vmatpush1.bf16.msra.mxu0 0
  %661 = vmatprep.subr.bf16.mxu0 0
  %662 = vmatpush1.bf16.msra.mxu0 0
  %663 = vmatprep.subr.bf16.mxu0 0
  %664 = vmatpush1.bf16.msra.mxu0 0
  %665 = vmatprep.subr.bf16.mxu0 0
  %666 = vmatpush1.bf16.msra.mxu0 0
  %667 = vmatprep.subr.bf16.mxu0 0
  %668 = vmatpush1.bf16.msra.mxu0 0
  %669 = vmatprep.subr.bf16.mxu0 0
  %670 = vmatpush1.bf16.msra.mxu0 0
  %671 = vmatprep.subr.bf16.mxu0 0
  %672 = vmatpush1.bf16.msra.mxu0 0
  %673 = vmatprep.subr.bf16.mxu0 0
  %674 = vmatpush1.bf16.msra.mxu0 0
  %675 = vmatprep.subr.bf16.mxu0 0
  %676 = vmatpush1.bf16.msra.mxu0 0
  %677 = vmatprep.subr.bf16.mxu0 0
  %678 = vmatpush1.bf16.msra.mxu0 0
  %679 = vmatprep.subr.bf16.mxu0 0
  %680 = vmatpush1.bf16.msra.mxu0 0
  %681 = vmatprep.subr.bf16.mxu0 0
  %682 = vmatpush1.bf16.msra.mxu0 0
  %683 = vmatprep.mubr.bf16.mxu0 0
  %684 = vmatmul.mubr.bf16.gmra.mrb[0].mxu0 %v649
  %v685 = vpop.f32.mrb[0].mxu0
  %v686 = vadd.f32 %v244, %v685
  %v687 = vpop.f32.mrb[0].mxu0
  %v688 = vpop.f32.mrb[0].mxu0
  %v689 = vpop.f32.mrb[0].mxu0
  %690 = vdwg.mxu0
  %v691 = vadd.f32 %v229, %v686
  %v692 = vxor.u32 %v691, 2147483648
  %v693 = vmul.f32 %v692, 1.442695
  %v694 = vpow.pop %v693
  %v695 = vadd.f32 %v694, 1.0
  %v696 = vrcp.pop %v695
  %v697 = vmul.f32 1.0, %v696
  %699 = vrot.lane.b32.xlu0 %v686, 64
  %v700 = vpop.permute.xlu0 %699
  %v702 = vmul.f32 %v697, %v700
  %704 = vrot.lane.b32.xlu0 %v702, 64
  %v705 = vpop.permute.xlu0 %704
  %v707 = vadd.f32 %v229, %v705
  %v708 = vtanh.pop %v707
  %v709 = vsub.f32 1.0, %v697
  %711 = vrot.lane.b32.xlu0 %v708, 96
  %v712 = vpop.permute.xlu0 %711
  %v714 = vmul.f32 %v709, %v712
  %v715 = vmul.f32 %v697, %v638
  %v716 = vadd.f32 %v714, %v715
  %718 = vrot.lane.b32.xlu0 %v716, 96
  %v719 = vpop.permute.xlu0 %718
  %721 = vst.msk [vmem:[#allocation3 + $0x28] sm:$0xff] %vm48, %v719
  %v722 = vpack.c.bf16 %v716, %v716
  %724 = vrot.lane.b32.xlu0 %v722, 96
  %v725 = vpop.permute.xlu0 %724
  %v727 = vsel %vm48, %v725, 0
  %729 = vmatprep.subr.bf16.mxu0 0
  %730 = vmatpush1.bf16.msra.mxu0 %v254
  %731 = vmatprep.subr.bf16.mxu0 0
  %732 = vmatpush1.bf16.msra.mxu0 %v255
  %733 = vmatprep.subr.bf16.mxu0 0
  %734 = vmatpush1.bf16.msra.mxu0 0
  %735 = vmatprep.subr.bf16.mxu0 0
  %736 = vmatpush1.bf16.msra.mxu0 0
  %737 = vmatprep.subr.bf16.mxu0 0
  %738 = vmatpush1.bf16.msra.mxu0 0
  %739 = vmatprep.subr.bf16.mxu0 0
  %740 = vmatpush1.bf16.msra.mxu0 0
  %741 = vmatprep.subr.bf16.mxu0 0
  %742 = vmatpush1.bf16.msra.mxu0 0
  %743 = vmatprep.subr.bf16.mxu0 0
  %744 = vmatpush1.bf16.msra.mxu0 0
  %745 = vmatprep.subr.bf16.mxu0 0
  %746 = vmatpush1.bf16.msra.mxu0 0
  %747 = vmatprep.subr.bf16.mxu0 0
  %748 = vmatpush1.bf16.msra.mxu0 0
  %749 = vmatprep.subr.bf16.mxu0 0
  %750 = vmatpush1.bf16.msra.mxu0 0
  %751 = vmatprep.subr.bf16.mxu0 0
  %752 = vmatpush1.bf16.msra.mxu0 0
  %753 = vmatprep.subr.bf16.mxu0 0
  %754 = vmatpush1.bf16.msra.mxu0 0
  %755 = vmatprep.subr.bf16.mxu0 0
  %756 = vmatpush1.bf16.msra.mxu0 0
  %757 = vmatprep.subr.bf16.mxu0 0
  %758 = vmatpush1.bf16.msra.mxu0 0
  %759 = vmatprep.subr.bf16.mxu0 0
  %760 = vmatpush1.bf16.msra.mxu0 0
  %761 = vmatprep.mubr.bf16.mxu0 0
  %762 = vmatmul.mubr.bf16.gmra.mrb[0].mxu0 %v727
  %v763 = vpop.f32.mrb[0].mxu0
  %v764 = vadd.f32 %v244, %v763
  %v765 = vpop.f32.mrb[0].mxu0
  %v766 = vpop.f32.mrb[0].mxu0
  %v767 = vpop.f32.mrb[0].mxu0
  %768 = vdwg.mxu0
  %v769 = vadd.f32 %v234, %v764
  %v770 = vxor.u32 %v769, 2147483648
  %v771 = vmul.f32 %v770, 1.442695
  %v772 = vpow.pop %v771
  %v773 = vadd.f32 %v772, 1.0
  %v774 = vrcp.pop %v773
  %v775 = vmul.f32 1.0, %v774
  %777 = vrot.lane.b32.xlu0 %v764, 64
  %v778 = vpop.permute.xlu0 %777
  %v780 = vmul.f32 %v775, %v778
  %782 = vrot.lane.b32.xlu0 %v780, 64
  %v783 = vpop.permute.xlu0 %782
  %v785 = vadd.f32 %v234, %v783
  %v786 = vtanh.pop %v785
  %v787 = vsub.f32 1.0, %v775
  %789 = vrot.lane.b32.xlu0 %v786, 96
  %v790 = vpop.permute.xlu0 %789
  %v792 = vmul.f32 %v787, %v790
  %v793 = vmul.f32 %v775, %v716
  %v794 = vadd.f32 %v792, %v793
  %796 = vrot.lane.b32.xlu0 %v794, 96
  %v797 = vpop.permute.xlu0 %796
  %799 = vst.msk [vmem:[#allocation3 + $0x30] sm:$0xff] %vm48, %v797
  %v800 = vpack.c.bf16 %v794, %v794
  %802 = vrot.lane.b32.xlu0 %v800, 96
  %v803 = vpop.permute.xlu0 %802
  %v805 = vsel %vm48, %v803, 0
  %807 = vmatprep.subr.bf16.mxu0 0
  %808 = vmatpush1.bf16.msra.mxu0 %v254
  %809 = vmatprep.subr.bf16.mxu0 0
  %810 = vmatpush1.bf16.msra.mxu0 %v255
  %811 = vmatprep.subr.bf16.mxu0 0
  %812 = vmatpush1.bf16.msra.mxu0 0
  %813 = vmatprep.subr.bf16.mxu0 0
  %814 = vmatpush1.bf16.msra.mxu0 0
  %815 = vmatprep.subr.bf16.mxu0 0
  %816 = vmatpush1.bf16.msra.mxu0 0
  %817 = vmatprep.subr.bf16.mxu0 0
  %818 = vmatpush1.bf16.msra.mxu0 0
  %819 = vmatprep.subr.bf16.mxu0 0
  %820 = vmatpush1.bf16.msra.mxu0 0
  %821 = vmatprep.subr.bf16.mxu0 0
  %822 = vmatpush1.bf16.msra.mxu0 0
  %823 = vmatprep.subr.bf16.mxu0 0
  %824 = vmatpush1.bf16.msra.mxu0 0
  %825 = vmatprep.subr.bf16.mxu0 0
  %826 = vmatpush1.bf16.msra.mxu0 0
  %827 = vmatprep.subr.bf16.mxu0 0
  %828 = vmatpush1.bf16.msra.mxu0 0
  %829 = vmatprep.subr.bf16.mxu0 0
  %830 = vmatpush1.bf16.msra.mxu0 0
  %831 = vmatprep.subr.bf16.mxu0 0
  %832 = vmatpush1.bf16.msra.mxu0 0
  %833 = vmatprep.subr.bf16.mxu0 0
  %834 = vmatpush1.bf16.msra.mxu0 0
  %835 = vmatprep.subr.bf16.mxu0 0
  %836 = vmatpush1.bf16.msra.mxu0 0
  %837 = vmatprep.subr.bf16.mxu0 0
  %838 = vmatpush1.bf16.msra.mxu0 0
  %839 = vmatprep.mubr.bf16.mxu0 0
  %840 = vmatmul.mubr.bf16.gmra.mrb[0].mxu0 %v805
  %v841 = vpop.f32.mrb[0].mxu0
  %v842 = vadd.f32 %v244, %v841
  %v843 = vpop.f32.mrb[0].mxu0
  %v844 = vpop.f32.mrb[0].mxu0
  %v845 = vpop.f32.mrb[0].mxu0
  %846 = vdwg.mxu0
  %v847 = vadd.f32 %v237, %v842
  %v848 = vxor.u32 %v847, 2147483648
  %v849 = vmul.f32 %v848, 1.442695
  %v850 = vpow.pop %v849
  %v851 = vadd.f32 %v850, 1.0
  %v852 = vrcp.pop %v851
  %v853 = vmul.f32 1.0, %v852
  %855 = vrot.lane.b32.xlu0 %v842, 64
  %v856 = vpop.permute.xlu0 %855
  %v858 = vmul.f32 %v853, %v856
  %860 = vrot.lane.b32.xlu0 %v858, 64
  %v861 = vpop.permute.xlu0 %860
  %v863 = vadd.f32 %v237, %v861
  %v864 = vtanh.pop %v863
  %v865 = vsub.f32 1.0, %v853
  %867 = vrot.lane.b32.xlu0 %v864, 96
  %v868 = vpop.permute.xlu0 %867
  %v870 = vmul.f32 %v865, %v868
  %v871 = vmul.f32 %v853, %v794
  %v872 = vadd.f32 %v870, %v871
  %874 = vrot.lane.b32.xlu0 %v872, 96
  %v875 = vpop.permute.xlu0 %874
  %877 = vst.msk [vmem:[#allocation3 + $0x38] sm:$0xff] %vm48, %v875
  %v878 = vld [vmem:[%s6] sm:$0xf]
  %v879 = vld [vmem:[%s6 + $0x4] sm:$0xf]
  %v880 = vld [vmem:[%s6 + $0x8] sm:$0xf]
  %v881 = vld [vmem:[%s6 + $0xc] sm:$0xf]
  %v882 = vld [vmem:[%s7] sm:$0xf]
  %v883 = vld [vmem:[%s7 + $0x4] sm:$0xf]
  %v884 = vld [vmem:[%s7 + $0x8] sm:$0xf]
  %v885 = vld [vmem:[%s7 + $0xc] sm:$0xf]
  %v886 = vld [vmem:[%s8] sm:$0x1]
  %v887 = vld [vmem:[%s9] sm:$0x1]
  %v888 = vld [vmem:[#allocation3] sm:$0xff]
  %v889 = vld [vmem:[#allocation3 + $0x8] sm:$0xff]
  %v890 = vld [vmem:[#allocation3 + $0x10] sm:$0xff]
  %v891 = vld [vmem:[#allocation3 + $0x18] sm:$0xff]
  %v892 = vld [vmem:[#allocation3 + $0x20] sm:$0xff]
  %v893 = vld [vmem:[#allocation3 + $0x28] sm:$0xff]
  %v894 = vld [vmem:[#allocation3 + $0x30] sm:$0xff]
  %v895 = vld [vmem:[#allocation3 + $0x38] sm:$0xff]
  %v896 = vpack.c.bf16 %v889, %v888
  %v897 = vpack.c.bf16 %v891, %v890
  %v898 = vpack.c.bf16 %v893, %v892
  %v899 = vpack.c.bf16 %v895, %v894
  %v901 = vlaneseq
  %v902 = vshrl.u32 %v901, 7
  %v903 = vsub.s32 0, %v902
  %v904 = vrot.slane %v886, %v903
  %v910 = vunpack.c.l.b16 %v878
  %v911 = vunpack.c.l.b16 %v879
  %v912 = vunpack.c.l.b16 %v880
  %v913 = vunpack.c.l.b16 %v881
  %v914 = vpack.c.b16 %v911, %v910
  %v915 = vpack.c.b16 %v913, %v912
  %v919 = vsel %vm48, %v896, 0
  %v922 = vsel %vm48, %v897, 0
  %v925 = vsel %vm48, %v898, 0
  %v928 = vsel %vm48, %v899, 0
  %930 = vmatprep.subr.bf16.mxu0 0
  %931 = vmatpush1.bf16.msra.mxu0 %v914
  %932 = vmatprep.subr.bf16.mxu0 0
  %933 = vmatpush1.bf16.msra.mxu0 %v915
  %934 = vmatprep.subr.bf16.mxu0 0
  %935 = vmatpush1.bf16.msra.mxu0 0
  %936 = vmatprep.subr.bf16.mxu0 0
  %937 = vmatpush1.bf16.msra.mxu0 0
  %938 = vmatprep.subr.bf16.mxu0 0
  %939 = vmatpush1.bf16.msra.mxu0 0
  %940 = vmatprep.subr.bf16.mxu0 0
  %941 = vmatpush1.bf16.msra.mxu0 0
  %942 = vmatprep.subr.bf16.mxu0 0
  %943 = vmatpush1.bf16.msra.mxu0 0
  %944 = vmatprep.subr.bf16.mxu0 0
  %945 = vmatpush1.bf16.msra.mxu0 0
  %946 = vmatprep.subr.bf16.mxu0 0
  %947 = vmatpush1.bf16.msra.mxu0 0
  %948 = vmatprep.subr.bf16.mxu0 0
  %949 = vmatpush1.bf16.msra.mxu0 0
  %950 = vmatprep.subr.bf16.mxu0 0
  %951 = vmatpush1.bf16.msra.mxu0 0
  %952 = vmatprep.subr.bf16.mxu0 0
  %953 = vmatpush1.bf16.msra.mxu0 0
  %954 = vmatprep.subr.bf16.mxu0 0
  %955 = vmatpush1.bf16.msra.mxu0 0
  %956 = vmatprep.subr.bf16.mxu0 0
  %957 = vmatpush1.bf16.msra.mxu0 0
  %958 = vmatprep.subr.bf16.mxu0 0
  %959 = vmatpush1.bf16.msra.mxu0 0
  %960 = vmatprep.subr.bf16.mxu0 0
  %961 = vmatpush1.bf16.msra.mxu0 0
  %962 = vmatprep.mubr.bf16.mxu0 0
  %963 = vmatmul.mubr.bf16.gmra.mrb[0].mxu0 %v919
  %v964 = vpop.f32.mrb[0].mxu0
  %v965 = vadd.f32 %v904, %v964
  %v966 = vpop.f32.mrb[0].mxu0
  %v967 = vpop.f32.mrb[0].mxu0
  %v968 = vadd.f32 %v904, %v967
  %v969 = vpop.f32.mrb[0].mxu0
  %970 = vmatprep.mubr.bf16.mxu0 0
  %971 = vmatmul.mubr.bf16.gmra.mrb[0].mxu0 %v922
  %v972 = vpop.f32.mrb[0].mxu0
  %v973 = vadd.f32 %v904, %v972
  %v974 = vpop.f32.mrb[0].mxu0
  %v975 = vpop.f32.mrb[0].mxu0
  %v976 = vadd.f32 %v904, %v975
  %v977 = vpop.f32.mrb[0].mxu0
  %978 = vmatprep.mubr.bf16.mxu0 0
  %979 = vmatmul.mubr.bf16.gmra.mrb[0].mxu0 %v925
  %v980 = vpop.f32.mrb[0].mxu0
  %v981 = vadd.f32 %v904, %v980
  %v982 = vpop.f32.mrb[0].mxu0
  %v983 = vpop.f32.mrb[0].mxu0
  %v984 = vadd.f32 %v904, %v983
  %v985 = vpop.f32.mrb[0].mxu0
  %986 = vmatprep.mubr.bf16.mxu0 0
  %987 = vmatmul.mubr.bf16.gmra.mrb[0].mxu0 %v928
  %v988 = vpop.f32.mrb[0].mxu0
  %v989 = vadd.f32 %v904, %v988
  %v990 = vpop.f32.mrb[0].mxu0
  %v991 = vpop.f32.mrb[0].mxu0
  %v992 = vadd.f32 %v904, %v991
  %v993 = vpop.f32.mrb[0].mxu0
  %994 = vdwg.mxu0
  %v996 = vlaneseq
  %v997 = vshrl.u32 %v996, 7
  %v998 = vsub.s32 0, %v997
  %v999 = vrot.slane %v887, %v998
  %v1005 = vunpack.c.l.b16 %v882
  %v1006 = vunpack.c.l.b16 %v883
  %v1007 = vunpack.c.l.b16 %v884
  %v1008 = vunpack.c.l.b16 %v885
  %v1009 = vpack.c.b16 %v1006, %v1005
  %v1010 = vpack.c.b16 %v1008, %v1007
  %1013 = vmatprep.subr.bf16.mxu0 0
  %1014 = vmatpush1.bf16.msra.mxu0 %v1009
  %1015 = vmatprep.subr.bf16.mxu0 0
  %1016 = vmatpush1.bf16.msra.mxu0 %v1010
  %1017 = vmatprep.subr.bf16.mxu0 0
  %1018 = vmatpush1.bf16.msra.mxu0 0
  %1019 = vmatprep.subr.bf16.mxu0 0
  %1020 = vmatpush1.bf16.msra.mxu0 0
  %1021 = vmatprep.subr.bf16.mxu0 0
  %1022 = vmatpush1.bf16.msra.mxu0 0
  %1023 = vmatprep.subr.bf16.mxu0 0
  %1024 = vmatpush1.bf16.msra.mxu0 0
  %1025 = vmatprep.subr.bf16.mxu0 0
  %1026 = vmatpush1.bf16.msra.mxu0 0
  %1027 = vmatprep.subr.bf16.mxu0 0
  %1028 = vmatpush1.bf16.msra.mxu0 0
  %1029 = vmatprep.subr.bf16.mxu0 0
  %1030 = vmatpush1.bf16.msra.mxu0 0
  %1031 = vmatprep.subr.bf16.mxu0 0
  %1032 = vmatpush1.bf16.msra.mxu0 0
  %1033 = vmatprep.subr.bf16.mxu0 0
  %1034 = vmatpush1.bf16.msra.mxu0 0
  %1035 = vmatprep.subr.bf16.mxu0 0
  %1036 = vmatpush1.bf16.msra.mxu0 0
  %1037 = vmatprep.subr.bf16.mxu0 0
  %1038 = vmatpush1.bf16.msra.mxu0 0
  %1039 = vmatprep.subr.bf16.mxu0 0
  %1040 = vmatpush1.bf16.msra.mxu0 0
  %1041 = vmatprep.subr.bf16.mxu0 0
  %1042 = vmatpush1.bf16.msra.mxu0 0
  %1043 = vmatprep.subr.bf16.mxu0 0
  %1044 = vmatpush1.bf16.msra.mxu0 0
  %1045 = vmatprep.mubr.bf16.mxu0 0
  %1046 = vmatmul.mubr.bf16.gmra.mrb[0].mxu0 %v259
  %v1047 = vpop.f32.mrb[0].mxu0
  %v1048 = vadd.f32 %v999, %v1047
  %v1049 = vpop.f32.mrb[0].mxu0
  %v1050 = vpop.f32.mrb[0].mxu0
  %v1051 = vpop.f32.mrb[0].mxu0
  %1052 = vdwg.mxu0
  %v1053 = vadd.f32 %v965, %v1048
  %v1054 = vxor.u32 %v1053, 2147483648
  %v1055 = vmul.f32 %v1054, 1.442695
  %v1056 = vpow.pop %v1055
  %v1057 = vadd.f32 %v1056, 1.0
  %v1058 = vrcp.pop %v1057
  %v1059 = vmul.f32 1.0, %v1058
  %1061 = vrot.lane.b32.xlu0 %v1048, 64
  %v1062 = vpop.permute.xlu0 %1061
  %v1064 = vmul.f32 %v1059, %v1062
  %1066 = vrot.lane.b32.xlu0 %v1064, 64
  %v1067 = vpop.permute.xlu0 %1066
  %v1069 = vadd.f32 %v965, %v1067
  %v1070 = vtanh.pop %v1069
  %v1071 = vsub.f32 1.0, %v1059
  %1073 = vrot.lane.b32.xlu0 %v1070, 96
  %v1074 = vpop.permute.xlu0 %1073
  %v1076 = vmul.f32 %v1071, %v1074
  %v1077 = vmul.f32 %v1059, 0.0
  %v1078 = vadd.f32 %v1076, %v1077
  %v1080 = vlaneseq
  %v1081 = vshrl.u32 %v1080, 7
  %v1082 = vsub.s32 0, %v1081
  %v1083 = vrot.slane %v122, %v1082
  %1084 = vrot.lane.b32.xlu0 %v1083, 32
  %v1085 = vpop.permute.xlu0 %1084
  %v1087 = vmul.f32 %v1078, %v1085
  %1089 = vrot.lane.b32.xlu0 %v1087, 96
  %v1090 = vpop.permute.xlu0 %1089
  %v1092 = vsel %vm48, %v1090, 0.0
  %1093 = vadd.xlane.f32.xlu0 %v1092
  %v1094 = vpop.xlane.xlu0 %1093
  %v1095 = vpack.c.bf16 %v1078, %v1078
  %1097 = vrot.lane.b32.xlu0 %v1095, 96
  %v1098 = vpop.permute.xlu0 %1097
  %v1100 = vsel %vm48, %v1098, 0
  %1102 = vmatprep.subr.bf16.mxu0 0
  %1103 = vmatpush1.bf16.msra.mxu0 %v1009
  %1104 = vmatprep.subr.bf16.mxu0 0
  %1105 = vmatpush1.bf16.msra.mxu0 %v1010
  %1106 = vmatprep.subr.bf16.mxu0 0
  %1107 = vmatpush1.bf16.msra.mxu0 0
  %1108 = vmatprep.subr.bf16.mxu0 0
  %1109 = vmatpush1.bf16.msra.mxu0 0
  %1110 = vmatprep.subr.bf16.mxu0 0
  %1111 = vmatpush1.bf16.msra.mxu0 0
  %1112 = vmatprep.subr.bf16.mxu0 0
  %1113 = vmatpush1.bf16.msra.mxu0 0
  %1114 = vmatprep.subr.bf16.mxu0 0
  %1115 = vmatpush1.bf16.msra.mxu0 0
  %1116 = vmatprep.subr.bf16.mxu0 0
  %1117 = vmatpush1.bf16.msra.mxu0 0
  %1118 = vmatprep.subr.bf16.mxu0 0
  %1119 = vmatpush1.bf16.msra.mxu0 0
  %1120 = vmatprep.subr.bf16.mxu0 0
  %1121 = vmatpush1.bf16.msra.mxu0 0
  %1122 = vmatprep.subr.bf16.mxu0 0
  %1123 = vmatpush1.bf16.msra.mxu0 0
  %1124 = vmatprep.subr.bf16.mxu0 0
  %1125 = vmatpush1.bf16.msra.mxu0 0
  %1126 = vmatprep.subr.bf16.mxu0 0
  %1127 = vmatpush1.bf16.msra.mxu0 0
  %1128 = vmatprep.subr.bf16.mxu0 0
  %1129 = vmatpush1.bf16.msra.mxu0 0
  %1130 = vmatprep.subr.bf16.mxu0 0
  %1131 = vmatpush1.bf16.msra.mxu0 0
  %1132 = vmatprep.subr.bf16.mxu0 0
  %1133 = vmatpush1.bf16.msra.mxu0 0
  %1134 = vmatprep.mubr.bf16.mxu0 0
  %1135 = vmatmul.mubr.bf16.gmra.mrb[0].mxu0 %v1100
  %v1136 = vpop.f32.mrb[0].mxu0
  %v1137 = vadd.f32 %v999, %v1136
  %v1138 = vpop.f32.mrb[0].mxu0
  %v1139 = vpop.f32.mrb[0].mxu0
  %v1140 = vpop.f32.mrb[0].mxu0
  %1141 = vdwg.mxu0
  %v1142 = vadd.f32 %v968, %v1137
  %v1143 = vxor.u32 %v1142, 2147483648
  %v1144 = vmul.f32 %v1143, 1.442695
  %v1145 = vpow.pop %v1144
  %v1146 = vadd.f32 %v1145, 1.0
  %v1147 = vrcp.pop %v1146
  %v1148 = vmul.f32 1.0, %v1147
  %1150 = vrot.lane.b32.xlu0 %v1137, 64
  %v1151 = vpop.permute.xlu0 %1150
  %v1153 = vmul.f32 %v1148, %v1151
  %1155 = vrot.lane.b32.xlu0 %v1153, 64
  %v1156 = vpop.permute.xlu0 %1155
  %v1158 = vadd.f32 %v968, %v1156
  %v1159 = vtanh.pop %v1158
  %v1160 = vsub.f32 1.0, %v1148
  %1162 = vrot.lane.b32.xlu0 %v1159, 96
  %v1163 = vpop.permute.xlu0 %1162
  %v1165 = vmul.f32 %v1160, %v1163
  %v1166 = vmul.f32 %v1148, %v1078
  %v1167 = vadd.f32 %v1165, %v1166
  %v1168 = vmul.f32 %v1167, %v1085
  %1170 = vrot.lane.b32.xlu0 %v1168, 96
  %v1171 = vpop.permute.xlu0 %1170
  %v1173 = vsel %vm48, %v1171, 0.0
  %1174 = vadd.xlane.f32.xlu0 %v1173
  %v1175 = vpop.xlane.xlu0 %1174
  %v1176 = vpack.c.bf16 %v1167, %v1167
  %1178 = vrot.lane.b32.xlu0 %v1176, 96
  %v1179 = vpop.permute.xlu0 %1178
  %v1181 = vsel %vm48, %v1179, 0
  %1183 = vmatprep.subr.bf16.mxu0 0
  %1184 = vmatpush1.bf16.msra.mxu0 %v1009
  %1185 = vmatprep.subr.bf16.mxu0 0
  %1186 = vmatpush1.bf16.msra.mxu0 %v1010
  %1187 = vmatprep.subr.bf16.mxu0 0
  %1188 = vmatpush1.bf16.msra.mxu0 0
  %1189 = vmatprep.subr.bf16.mxu0 0
  %1190 = vmatpush1.bf16.msra.mxu0 0
  %1191 = vmatprep.subr.bf16.mxu0 0
  %1192 = vmatpush1.bf16.msra.mxu0 0
  %1193 = vmatprep.subr.bf16.mxu0 0
  %1194 = vmatpush1.bf16.msra.mxu0 0
  %1195 = vmatprep.subr.bf16.mxu0 0
  %1196 = vmatpush1.bf16.msra.mxu0 0
  %1197 = vmatprep.subr.bf16.mxu0 0
  %1198 = vmatpush1.bf16.msra.mxu0 0
  %1199 = vmatprep.subr.bf16.mxu0 0
  %1200 = vmatpush1.bf16.msra.mxu0 0
  %1201 = vmatprep.subr.bf16.mxu0 0
  %1202 = vmatpush1.bf16.msra.mxu0 0
  %1203 = vmatprep.subr.bf16.mxu0 0
  %1204 = vmatpush1.bf16.msra.mxu0 0
  %1205 = vmatprep.subr.bf16.mxu0 0
  %1206 = vmatpush1.bf16.msra.mxu0 0
  %1207 = vmatprep.subr.bf16.mxu0 0
  %1208 = vmatpush1.bf16.msra.mxu0 0
  %1209 = vmatprep.subr.bf16.mxu0 0
  %1210 = vmatpush1.bf16.msra.mxu0 0
  %1211 = vmatprep.subr.bf16.mxu0 0
  %1212 = vmatpush1.bf16.msra.mxu0 0
  %1213 = vmatprep.subr.bf16.mxu0 0
  %1214 = vmatpush1.bf16.msra.mxu0 0
  %1215 = vmatprep.mubr.bf16.mxu0 0
  %1216 = vmatmul.mubr.bf16.gmra.mrb[0].mxu0 %v1181
  %v1217 = vpop.f32.mrb[0].mxu0
  %v1218 = vadd.f32 %v999, %v1217
  %v1219 = vpop.f32.mrb[0].mxu0
  %v1220 = vpop.f32.mrb[0].mxu0
  %v1221 = vpop.f32.mrb[0].mxu0
  %1222 = vdwg.mxu0
  %v1223 = vadd.f32 %v973, %v1218
  %v1224 = vxor.u32 %v1223, 2147483648
  %v1225 = vmul.f32 %v1224, 1.442695
  %v1226 = vpow.pop %v1225
  %v1227 = vadd.f32 %v1226, 1.0
  %v1228 = vrcp.pop %v1227
  %v1229 = vmul.f32 1.0, %v1228
  %1231 = vrot.lane.b32.xlu0 %v1218, 64
  %v1232 = vpop.permute.xlu0 %1231
  %v1234 = vmul.f32 %v1229, %v1232
  %1236 = vrot.lane.b32.xlu0 %v1234, 64
  %v1237 = vpop.permute.xlu0 %1236
  %v1239 = vadd.f32 %v973, %v1237
  %v1240 = vtanh.pop %v1239
  %v1241 = vsub.f32 1.0, %v1229
  %1243 = vrot.lane.b32.xlu0 %v1240, 96
  %v1244 = vpop.permute.xlu0 %1243
  %v1246 = vmul.f32 %v1241, %v1244
  %v1247 = vmul.f32 %v1229, %v1167
  %v1248 = vadd.f32 %v1246, %v1247
  %v1249 = vmul.f32 %v1248, %v1085
  %1251 = vrot.lane.b32.xlu0 %v1249, 96
  %v1252 = vpop.permute.xlu0 %1251
  %v1254 = vsel %vm48, %v1252, 0.0
  %1255 = vadd.xlane.f32.xlu0 %v1254
  %v1256 = vpop.xlane.xlu0 %1255
  %v1257 = vpack.c.bf16 %v1248, %v1248
  %1259 = vrot.lane.b32.xlu0 %v1257, 96
  %v1260 = vpop.permute.xlu0 %1259
  %v1262 = vsel %vm48, %v1260, 0
  %1264 = vmatprep.subr.bf16.mxu0 0
  %1265 = vmatpush1.bf16.msra.mxu0 %v1009
  %1266 = vmatprep.subr.bf16.mxu0 0
  %1267 = vmatpush1.bf16.msra.mxu0 %v1010
  %1268 = vmatprep.subr.bf16.mxu0 0
  %1269 = vmatpush1.bf16.msra.mxu0 0
  %1270 = vmatprep.subr.bf16.mxu0 0
  %1271 = vmatpush1.bf16.msra.mxu0 0
  %1272 = vmatprep.subr.bf16.mxu0 0
  %1273 = vmatpush1.bf16.msra.mxu0 0
  %1274 = vmatprep.subr.bf16.mxu0 0
  %1275 = vmatpush1.bf16.msra.mxu0 0
  %1276 = vmatprep.subr.bf16.mxu0 0
  %1277 = vmatpush1.bf16.msra.mxu0 0
  %1278 = vmatprep.subr.bf16.mxu0 0
  %1279 = vmatpush1.bf16.msra.mxu0 0
  %1280 = vmatprep.subr.bf16.mxu0 0
  %1281 = vmatpush1.bf16.msra.mxu0 0
  %1282 = vmatprep.subr.bf16.mxu0 0
  %1283 = vmatpush1.bf16.msra.mxu0 0
  %1284 = vmatprep.subr.bf16.mxu0 0
  %1285 = vmatpush1.bf16.msra.mxu0 0
  %1286 = vmatprep.subr.bf16.mxu0 0
  %1287 = vmatpush1.bf16.msra.mxu0 0
  %1288 = vmatprep.subr.bf16.mxu0 0
  %1289 = vmatpush1.bf16.msra.mxu0 0
  %1290 = vmatprep.subr.bf16.mxu0 0
  %1291 = vmatpush1.bf16.msra.mxu0 0
  %1292 = vmatprep.subr.bf16.mxu0 0
  %1293 = vmatpush1.bf16.msra.mxu0 0
  %1294 = vmatprep.subr.bf16.mxu0 0
  %1295 = vmatpush1.bf16.msra.mxu0 0
  %1296 = vmatprep.mubr.bf16.mxu0 0
  %1297 = vmatmul.mubr.bf16.gmra.mrb[0].mxu0 %v1262
  %v1298 = vpop.f32.mrb[0].mxu0
  %v1299 = vadd.f32 %v999, %v1298
  %v1300 = vpop.f32.mrb[0].mxu0
  %v1301 = vpop.f32.mrb[0].mxu0
  %v1302 = vpop.f32.mrb[0].mxu0
  %1303 = vdwg.mxu0
  %v1304 = vadd.f32 %v976, %v1299
  %v1305 = vxor.u32 %v1304, 2147483648
  %v1306 = vmul.f32 %v1305, 1.442695
  %v1307 = vpow.pop %v1306
  %v1308 = vadd.f32 %v1307, 1.0
  %v1309 = vrcp.pop %v1308
  %v1310 = vmul.f32 1.0, %v1309
  %1312 = vrot.lane.b32.xlu0 %v1299, 64
  %v1313 = vpop.permute.xlu0 %1312
  %v1315 = vmul.f32 %v1310, %v1313
  %1317 = vrot.lane.b32.xlu0 %v1315, 64
  %v1318 = vpop.permute.xlu0 %1317
  %v1320 = vadd.f32 %v976, %v1318
  %v1321 = vtanh.pop %v1320
  %v1322 = vsub.f32 1.0, %v1310
  %1324 = vrot.lane.b32.xlu0 %v1321, 96
  %v1325 = vpop.permute.xlu0 %1324
  %v1327 = vmul.f32 %v1322, %v1325
  %v1328 = vmul.f32 %v1310, %v1248
  %v1329 = vadd.f32 %v1327, %v1328
  %v1330 = vmul.f32 %v1329, %v1085
  %1332 = vrot.lane.b32.xlu0 %v1330, 96
  %v1333 = vpop.permute.xlu0 %1332
  %v1335 = vsel %vm48, %v1333, 0.0
  %1336 = vadd.xlane.f32.xlu0 %v1335
  %v1337 = vpop.xlane.xlu0 %1336
  %v1338 = vpack.c.bf16 %v1329, %v1329
  %1340 = vrot.lane.b32.xlu0 %v1338, 96
  %v1341 = vpop.permute.xlu0 %1340
  %v1343 = vsel %vm48, %v1341, 0
  %1345 = vmatprep.subr.bf16.mxu0 0
  %1346 = vmatpush1.bf16.msra.mxu0 %v1009
  %1347 = vmatprep.subr.bf16.mxu0 0
  %1348 = vmatpush1.bf16.msra.mxu0 %v1010
  %1349 = vmatprep.subr.bf16.mxu0 0
  %1350 = vmatpush1.bf16.msra.mxu0 0
  %1351 = vmatprep.subr.bf16.mxu0 0
  %1352 = vmatpush1.bf16.msra.mxu0 0
  %1353 = vmatprep.subr.bf16.mxu0 0
  %1354 = vmatpush1.bf16.msra.mxu0 0
  %1355 = vmatprep.subr.bf16.mxu0 0
  %1356 = vmatpush1.bf16.msra.mxu0 0
  %1357 = vmatprep.subr.bf16.mxu0 0
  %1358 = vmatpush1.bf16.msra.mxu0 0
  %1359 = vmatprep.subr.bf16.mxu0 0
  %1360 = vmatpush1.bf16.msra.mxu0 0
  %1361 = vmatprep.subr.bf16.mxu0 0
  %1362 = vmatpush1.bf16.msra.mxu0 0
  %1363 = vmatprep.subr.bf16.mxu0 0
  %1364 = vmatpush1.bf16.msra.mxu0 0
  %1365 = vmatprep.subr.bf16.mxu0 0
  %1366 = vmatpush1.bf16.msra.mxu0 0
  %1367 = vmatprep.subr.bf16.mxu0 0
  %1368 = vmatpush1.bf16.msra.mxu0 0
  %1369 = vmatprep.subr.bf16.mxu0 0
  %1370 = vmatpush1.bf16.msra.mxu0 0
  %1371 = vmatprep.subr.bf16.mxu0 0
  %1372 = vmatpush1.bf16.msra.mxu0 0
  %1373 = vmatprep.subr.bf16.mxu0 0
  %1374 = vmatpush1.bf16.msra.mxu0 0
  %1375 = vmatprep.subr.bf16.mxu0 0
  %1376 = vmatpush1.bf16.msra.mxu0 0
  %1377 = vmatprep.mubr.bf16.mxu0 0
  %1378 = vmatmul.mubr.bf16.gmra.mrb[0].mxu0 %v1343
  %v1379 = vpop.f32.mrb[0].mxu0
  %v1380 = vadd.f32 %v999, %v1379
  %v1381 = vpop.f32.mrb[0].mxu0
  %v1382 = vpop.f32.mrb[0].mxu0
  %v1383 = vpop.f32.mrb[0].mxu0
  %1384 = vdwg.mxu0
  %v1385 = vadd.f32 %v981, %v1380
  %v1386 = vxor.u32 %v1385, 2147483648
  %v1387 = vmul.f32 %v1386, 1.442695
  %v1388 = vpow.pop %v1387
  %v1389 = vadd.f32 %v1388, 1.0
  %v1390 = vrcp.pop %v1389
  %v1391 = vmul.f32 1.0, %v1390
  %1393 = vrot.lane.b32.xlu0 %v1380, 64
  %v1394 = vpop.permute.xlu0 %1393
  %v1396 = vmul.f32 %v1391, %v1394
  %1398 = vrot.lane.b32.xlu0 %v1396, 64
  %v1399 = vpop.permute.xlu0 %1398
  %v1401 = vadd.f32 %v981, %v1399
  %v1402 = vtanh.pop %v1401
  %v1403 = vsub.f32 1.0, %v1391
  %1405 = vrot.lane.b32.xlu0 %v1402, 96
  %v1406 = vpop.permute.xlu0 %1405
  %v1408 = vmul.f32 %v1403, %v1406
  %v1409 = vmul.f32 %v1391, %v1329
  %v1410 = vadd.f32 %v1408, %v1409
  %v1411 = vmul.f32 %v1410, %v1085
  %1413 = vrot.lane.b32.xlu0 %v1411, 96
  %v1414 = vpop.permute.xlu0 %1413
  %v1416 = vsel %vm48, %v1414, 0.0
  %1417 = vadd.xlane.f32.xlu0 %v1416
  %v1418 = vpop.xlane.xlu0 %1417
  %v1419 = vpack.c.bf16 %v1410, %v1410
  %1421 = vrot.lane.b32.xlu0 %v1419, 96
  %v1422 = vpop.permute.xlu0 %1421
  %v1424 = vsel %vm48, %v1422, 0
  %1426 = vmatprep.subr.bf16.mxu0 0
  %1427 = vmatpush1.bf16.msra.mxu0 %v1009
  %1428 = vmatprep.subr.bf16.mxu0 0
  %1429 = vmatpush1.bf16.msra.mxu0 %v1010
  %1430 = vmatprep.subr.bf16.mxu0 0
  %1431 = vmatpush1.bf16.msra.mxu0 0
  %1432 = vmatprep.subr.bf16.mxu0 0
  %1433 = vmatpush1.bf16.msra.mxu0 0
  %1434 = vmatprep.subr.bf16.mxu0 0
  %1435 = vmatpush1.bf16.msra.mxu0 0
  %1436 = vmatprep.subr.bf16.mxu0 0
  %1437 = vmatpush1.bf16.msra.mxu0 0
  %1438 = vmatprep.subr.bf16.mxu0 0
  %1439 = vmatpush1.bf16.msra.mxu0 0
  %1440 = vmatprep.subr.bf16.mxu0 0
  %1441 = vmatpush1.bf16.msra.mxu0 0
  %1442 = vmatprep.subr.bf16.mxu0 0
  %1443 = vmatpush1.bf16.msra.mxu0 0
  %1444 = vmatprep.subr.bf16.mxu0 0
  %1445 = vmatpush1.bf16.msra.mxu0 0
  %1446 = vmatprep.subr.bf16.mxu0 0
  %1447 = vmatpush1.bf16.msra.mxu0 0
  %1448 = vmatprep.subr.bf16.mxu0 0
  %1449 = vmatpush1.bf16.msra.mxu0 0
  %1450 = vmatprep.subr.bf16.mxu0 0
  %1451 = vmatpush1.bf16.msra.mxu0 0
  %1452 = vmatprep.subr.bf16.mxu0 0
  %1453 = vmatpush1.bf16.msra.mxu0 0
  %1454 = vmatprep.subr.bf16.mxu0 0
  %1455 = vmatpush1.bf16.msra.mxu0 0
  %1456 = vmatprep.subr.bf16.mxu0 0
  %1457 = vmatpush1.bf16.msra.mxu0 0
  %1458 = vmatprep.mubr.bf16.mxu0 0
  %1459 = vmatmul.mubr.bf16.gmra.mrb[0].mxu0 %v1424
  %v1460 = vpop.f32.mrb[0].mxu0
  %v1461 = vadd.f32 %v999, %v1460
  %v1462 = vpop.f32.mrb[0].mxu0
  %v1463 = vpop.f32.mrb[0].mxu0
  %v1464 = vpop.f32.mrb[0].mxu0
  %1465 = vdwg.mxu0
  %v1466 = vadd.f32 %v984, %v1461
  %v1467 = vxor.u32 %v1466, 2147483648
  %v1468 = vmul.f32 %v1467, 1.442695
  %v1469 = vpow.pop %v1468
  %v1470 = vadd.f32 %v1469, 1.0
  %v1471 = vrcp.pop %v1470
  %v1472 = vmul.f32 1.0, %v1471
  %1474 = vrot.lane.b32.xlu0 %v1461, 64
  %v1475 = vpop.permute.xlu0 %1474
  %v1477 = vmul.f32 %v1472, %v1475
  %1479 = vrot.lane.b32.xlu0 %v1477, 64
  %v1480 = vpop.permute.xlu0 %1479
  %v1482 = vadd.f32 %v984, %v1480
  %v1483 = vtanh.pop %v1482
  %v1484 = vsub.f32 1.0, %v1472
  %1486 = vrot.lane.b32.xlu0 %v1483, 96
  %v1487 = vpop.permute.xlu0 %1486
  %v1489 = vmul.f32 %v1484, %v1487
  %v1490 = vmul.f32 %v1472, %v1410
  %v1491 = vadd.f32 %v1489, %v1490
  %v1492 = vmul.f32 %v1491, %v1085
  %1494 = vrot.lane.b32.xlu0 %v1492, 96
  %v1495 = vpop.permute.xlu0 %1494
  %v1497 = vsel %vm48, %v1495, 0.0
  %1498 = vadd.xlane.f32.xlu0 %v1497
  %v1499 = vpop.xlane.xlu0 %1498
  %v1500 = vpack.c.bf16 %v1491, %v1491
  %1502 = vrot.lane.b32.xlu0 %v1500, 96
  %v1503 = vpop.permute.xlu0 %1502
  %v1505 = vsel %vm48, %v1503, 0
  %1507 = vmatprep.subr.bf16.mxu0 0
  %1508 = vmatpush1.bf16.msra.mxu0 %v1009
  %1509 = vmatprep.subr.bf16.mxu0 0
  %1510 = vmatpush1.bf16.msra.mxu0 %v1010
  %1511 = vmatprep.subr.bf16.mxu0 0
  %1512 = vmatpush1.bf16.msra.mxu0 0
  %1513 = vmatprep.subr.bf16.mxu0 0
  %1514 = vmatpush1.bf16.msra.mxu0 0
  %1515 = vmatprep.subr.bf16.mxu0 0
  %1516 = vmatpush1.bf16.msra.mxu0 0
  %1517 = vmatprep.subr.bf16.mxu0 0
  %1518 = vmatpush1.bf16.msra.mxu0 0
  %1519 = vmatprep.subr.bf16.mxu0 0
  %1520 = vmatpush1.bf16.msra.mxu0 0
  %1521 = vmatprep.subr.bf16.mxu0 0
  %1522 = vmatpush1.bf16.msra.mxu0 0
  %1523 = vmatprep.subr.bf16.mxu0 0
  %1524 = vmatpush1.bf16.msra.mxu0 0
  %1525 = vmatprep.subr.bf16.mxu0 0
  %1526 = vmatpush1.bf16.msra.mxu0 0
  %1527 = vmatprep.subr.bf16.mxu0 0
  %1528 = vmatpush1.bf16.msra.mxu0 0
  %1529 = vmatprep.subr.bf16.mxu0 0
  %1530 = vmatpush1.bf16.msra.mxu0 0
  %1531 = vmatprep.subr.bf16.mxu0 0
  %1532 = vmatpush1.bf16.msra.mxu0 0
  %1533 = vmatprep.subr.bf16.mxu0 0
  %1534 = vmatpush1.bf16.msra.mxu0 0
  %1535 = vmatprep.subr.bf16.mxu0 0
  %1536 = vmatpush1.bf16.msra.mxu0 0
  %1537 = vmatprep.subr.bf16.mxu0 0
  %1538 = vmatpush1.bf16.msra.mxu0 0
  %1539 = vmatprep.mubr.bf16.mxu0 0
  %1540 = vmatmul.mubr.bf16.gmra.mrb[0].mxu0 %v1505
  %v1541 = vpop.f32.mrb[0].mxu0
  %v1542 = vadd.f32 %v999, %v1541
  %v1543 = vpop.f32.mrb[0].mxu0
  %v1544 = vpop.f32.mrb[0].mxu0
  %v1545 = vpop.f32.mrb[0].mxu0
  %1546 = vdwg.mxu0
  %v1547 = vadd.f32 %v989, %v1542
  %v1548 = vxor.u32 %v1547, 2147483648
  %v1549 = vmul.f32 %v1548, 1.442695
  %v1550 = vpow.pop %v1549
  %v1551 = vadd.f32 %v1550, 1.0
  %v1552 = vrcp.pop %v1551
  %v1553 = vmul.f32 1.0, %v1552
  %1555 = vrot.lane.b32.xlu0 %v1542, 64
  %v1556 = vpop.permute.xlu0 %1555
  %v1558 = vmul.f32 %v1553, %v1556
  %1560 = vrot.lane.b32.xlu0 %v1558, 64
  %v1561 = vpop.permute.xlu0 %1560
  %v1563 = vadd.f32 %v989, %v1561
  %v1564 = vtanh.pop %v1563
  %v1565 = vsub.f32 1.0, %v1553
  %1567 = vrot.lane.b32.xlu0 %v1564, 96
  %v1568 = vpop.permute.xlu0 %1567
  %v1570 = vmul.f32 %v1565, %v1568
  %v1571 = vmul.f32 %v1553, %v1491
  %v1572 = vadd.f32 %v1570, %v1571
  %v1573 = vmul.f32 %v1572, %v1085
  %1575 = vrot.lane.b32.xlu0 %v1573, 96
  %v1576 = vpop.permute.xlu0 %1575
  %v1578 = vsel %vm48, %v1576, 0.0
  %1579 = vadd.xlane.f32.xlu0 %v1578
  %v1580 = vpop.xlane.xlu0 %1579
  %v1581 = vpack.c.bf16 %v1572, %v1572
  %1583 = vrot.lane.b32.xlu0 %v1581, 96
  %v1584 = vpop.permute.xlu0 %1583
  %v1586 = vsel %vm48, %v1584, 0
  %1588 = vmatprep.subr.bf16.mxu0 0
  %1589 = vmatpush1.bf16.msra.mxu0 %v1009
  %1590 = vmatprep.subr.bf16.mxu0 0
  %1591 = vmatpush1.bf16.msra.mxu0 %v1010
  %1592 = vmatprep.subr.bf16.mxu0 0
  %1593 = vmatpush1.bf16.msra.mxu0 0
  %1594 = vmatprep.subr.bf16.mxu0 0
  %1595 = vmatpush1.bf16.msra.mxu0 0
  %1596 = vmatprep.subr.bf16.mxu0 0
  %1597 = vmatpush1.bf16.msra.mxu0 0
  %1598 = vmatprep.subr.bf16.mxu0 0
  %1599 = vmatpush1.bf16.msra.mxu0 0
  %1600 = vmatprep.subr.bf16.mxu0 0
  %1601 = vmatpush1.bf16.msra.mxu0 0
  %1602 = vmatprep.subr.bf16.mxu0 0
  %1603 = vmatpush1.bf16.msra.mxu0 0
  %1604 = vmatprep.subr.bf16.mxu0 0
  %1605 = vmatpush1.bf16.msra.mxu0 0
  %1606 = vmatprep.subr.bf16.mxu0 0
  %1607 = vmatpush1.bf16.msra.mxu0 0
  %1608 = vmatprep.subr.bf16.mxu0 0
  %1609 = vmatpush1.bf16.msra.mxu0 0
  %1610 = vmatprep.subr.bf16.mxu0 0
  %1611 = vmatpush1.bf16.msra.mxu0 0
  %1612 = vmatprep.subr.bf16.mxu0 0
  %1613 = vmatpush1.bf16.msra.mxu0 0
  %1614 = vmatprep.subr.bf16.mxu0 0
  %1615 = vmatpush1.bf16.msra.mxu0 0
  %1616 = vmatprep.subr.bf16.mxu0 0
  %1617 = vmatpush1.bf16.msra.mxu0 0
  %1618 = vmatprep.subr.bf16.mxu0 0
  %1619 = vmatpush1.bf16.msra.mxu0 0
  %1620 = vmatprep.mubr.bf16.mxu0 0
  %1621 = vmatmul.mubr.bf16.gmra.mrb[0].mxu0 %v1586
  %v1622 = vpop.f32.mrb[0].mxu0
  %v1623 = vadd.f32 %v999, %v1622
  %v1624 = vpop.f32.mrb[0].mxu0
  %v1625 = vpop.f32.mrb[0].mxu0
  %v1626 = vpop.f32.mrb[0].mxu0
  %1627 = vdwg.mxu0
  %v1628 = vadd.f32 %v992, %v1623
  %v1629 = vxor.u32 %v1628, 2147483648
  %v1630 = vmul.f32 %v1629, 1.442695
  %v1631 = vpow.pop %v1630
  %v1632 = vadd.f32 %v1631, 1.0
  %v1633 = vrcp.pop %v1632
  %v1634 = vmul.f32 1.0, %v1633
  %1636 = vrot.lane.b32.xlu0 %v1623, 64
  %v1637 = vpop.permute.xlu0 %1636
  %v1639 = vmul.f32 %v1634, %v1637
  %1641 = vrot.lane.b32.xlu0 %v1639, 64
  %v1642 = vpop.permute.xlu0 %1641
  %v1644 = vadd.f32 %v992, %v1642
  %v1645 = vtanh.pop %v1644
  %v1646 = vsub.f32 1.0, %v1634
  %1648 = vrot.lane.b32.xlu0 %v1645, 96
  %v1649 = vpop.permute.xlu0 %1648
  %v1651 = vmul.f32 %v1646, %v1649
  %v1652 = vmul.f32 %v1634, %v1572
  %v1653 = vadd.f32 %v1651, %v1652
  %v1654 = vmul.f32 %v1653, %v1085
  %1656 = vrot.lane.b32.xlu0 %v1654, 96
  %v1657 = vpop.permute.xlu0 %1656
  %v1659 = vsel %vm48, %v1657, 0.0
  %1660 = vadd.xlane.f32.xlu0 %v1659
  %v1661 = vpop.xlane.xlu0 %1660
  %vm1662 = vcmask 7168
  %v1663 = vsel %vm1662, %v1094, %v1175
  %vm1664 = vcmask 15360
  %v1665 = vsel %vm1664, %v1663, %v1256
  %vm1666 = vcmask 23552
  %v1667 = vsel %vm1666, %v1665, %v1337
  %vm1668 = vcmask 31744
  %v1669 = vsel %vm1668, %v1667, %v1418
  %vm1670 = vcmask 39936
  %v1671 = vsel %vm1670, %v1669, %v1499
  %vm1672 = vcmask 48128
  %v1673 = vsel %vm1672, %v1671, %v1580
  %vm1674 = vcmask 56320
  %v1675 = vsel %vm1674, %v1673, %v1661
  %v1676 = vld [vmem:[#allocation6] sm:$0x1]
  %v1678 = vlaneseq
  %v1679 = vshrl.u32 %v1678, 7
  %v1680 = vsub.s32 0, %v1679
  %v1681 = vrot.slane %v1676, %v1680
  %1682 = vset.pattern.permute.xlu0 0
  %1683 = vperm.xlu0 %1682, %v1681
  %v1684 = vpop.permute.xlu0 %1683
  %v1686 = vadd.f32 %v1675, %v1684
  %v1687 = vxor.u32 %v1686, 2147483648
  %v1688 = vmul.f32 %v1687, 1.442695
  %v1689 = vpow.pop %v1688
  %v1690 = vadd.f32 %v1689, 1.0
  %v1691 = vrcp.pop %v1690
  %v1692 = vmul.f32 1.0, %v1691
  %vm1693 = vcmask 64512
  %1694 = vst.msk [vmem:[%s12] sm:$0xff] %vm1693, %v1692
  // Predicated region
  $region46: #{gru_decoder_forward.1} parent=0 // pred_check
    _
  $region47: #{gru_decoder_forward.1} parent=0 // pred_check_branch
    %1696 = sbr.rel (0) target = $region49
  $region48: #{gru_decoder_forward.1} parent=0 // pred_region
    _
  $region49: #{gru_decoder_forward.1} parent=0 // pred_fallthru
    _
  // Predicated region
  $region50: #{gru_decoder_forward.1} parent=0 // pred_check
    _
  $region51: #{gru_decoder_forward.1} parent=0 // pred_check_branch
    %1698 = sbr.rel (0) target = $region53
  $region52: #{gru_decoder_forward.1} parent=0 // pred_region
    _
  $region53: #{gru_decoder_forward.1} parent=0 // pred_fallthru
    _

</llo_original>
